<compile_context>
chip_gen: v5e
topology: v5e:2x2
jax: 0.10.0
libtpu: 0.0.40
codegen_flags: <defaults>
</compile_context>

<pallas_src>
import jax
import jax.numpy as jnp
from jax.experimental import pallas as pl
from jax.experimental.pallas import tpu as pltpu


def lpu_kernel(xpad_ref, w_ref, b_ref, o_ref):
    # xpad_ref: (1, H+2, W+2, Cp)  zero-padded input slab (spatial pad=1)
    # w_ref   : (9, Cp)            depthwise taps, row k = (di*3 + dj)
    # b_ref   : (1, Cp)            conv bias
    # o_ref   : (1, H,   W,   Cp)  residual + conv output
    _, h, w, c = o_ref.shape
    xpad = xpad_ref[0]                       # (H+2, W+2, Cp), f32
    wts = w_ref[...]                         # (9, Cp)

    # residual term + bias, then accumulate the 9 shifted taps (pure VPU FMAs).
    acc = xpad[1:1 + h, 1:1 + w, :] + b_ref[...]          # (H, W, Cp)
    for di in range(3):
        for dj in range(3):
            tap = xpad[di:di + h, dj:dj + w, :]           # static slice, (H, W, Cp)
            acc = acc + tap * wts[di * 3 + dj]            # (Cp,) broadcast over H, W
    o_ref[0] = acc.astype(o_ref.dtype)


def prepack_params(weight, bias, c_pad):
    """weight: (C, 1, 3, 3), bias: (C,) -> (9, Cp) taps and (1, Cp) bias, f32."""
    c = weight.shape[0]
    w9c = weight.reshape(c, 9).T.astype(jnp.float32)                  # (9, C)
    w9c = jnp.pad(w9c, ((0, 0), (0, c_pad - c)))
    b2d = jnp.pad(bias.reshape(1, c).astype(jnp.float32), ((0, 0), (0, c_pad - c)))
    return w9c, b2d


def local_perception_unit(x_nchw, weight, bias):
    """
    x_nchw : (N, C, H, W)
    weight : (C, 1, 3, 3)   torch depthwise Conv2d layout (groups=C)
    bias   : (C,)
    returns: (N, C, H, W)   = x + dw_conv(x)
    """
    n, c, h, w = x_nchw.shape
    c_pad = ((c + 127) // 128) * 128

    # NCHW -> NHWC (channels on lanes), spatial zero-pad 1, channel pad to c_pad.
    x_nhwc = jnp.transpose(x_nchw, (0, 2, 3, 1)).astype(jnp.float32)
    x_p = jnp.pad(x_nhwc, ((0, 0), (1, 1), (1, 1), (0, c_pad - c)))

    w9c, b2d = prepack_params(weight, bias, c_pad)

    cost = pl.CostEstimate(
        flops=2 * n * h * w * c_pad * 9,
        transcendentals=0,
        bytes_accessed=4 * (x_p.size + n * h * w * c_pad + w9c.size + b2d.size),
    )

    out_nhwc = pl.pallas_call(
        lpu_kernel,
        out_shape=jax.ShapeDtypeStruct((n, h, w, c_pad), jnp.float32),
        grid=(n,),
        in_specs=[
            pl.BlockSpec((1, h + 2, w + 2, c_pad), lambda i: (i, 0, 0, 0)),
            pl.BlockSpec((9, c_pad), lambda i: (0, 0)),
            pl.BlockSpec((1, c_pad), lambda i: (0, 0)),
        ],
        out_specs=pl.BlockSpec((1, h, w, c_pad), lambda i: (i, 0, 0, 0)),
        compiler_params=pltpu.CompilerParams(dimension_semantics=("parallel",)),
        cost_estimate=cost,
    )(x_p, w9c, b2d)

    # Drop channel padding, back to NCHW to match the PyTorch module.
    out = out_nhwc[..., :c].astype(x_nchw.dtype)
    return jnp.transpose(out, (0, 3, 1, 2))


def _reference(x, weight, bias):
    """Plain-JAX reference: x + depthwise 3x3 conv (padding=1, groups=C)."""
    c = x.shape[1]
    y = jax.lax.conv_general_dilated(
        x, weight,
        window_strides=(1, 1),
        padding=((1, 1), (1, 1)),
        dimension_numbers=("NCHW", "OIHW", "NCHW"),
        feature_group_count=c,
    ) + bias[None, :, None, None]
    return x + y


if __name__ == "__main__":
    key = jax.random.PRNGKey(0)
    k_x, k_w, k_b = jax.random.split(key, 3)

    # Small shapes consistent with LocalPerceptionUnit(channels=4).
    N, C, H, W = 2, 4, 16, 16
    KH, KW = 3, 3

    x = jax.random.normal(k_x, (N, C, H, W), dtype=jnp.float32)
    fan_in = 1 * KH * KW                      # depthwise: in_channels/groups = 1
    bound = 1.0 / jnp.sqrt(fan_in)
    weight = jax.random.uniform(k_w, (C, 1, KH, KW), minval=-bound, maxval=bound,
                                dtype=jnp.float32)
    bias = jax.random.uniform(k_b, (C,), minval=-bound, maxval=bound,
                              dtype=jnp.float32)

    lpu = jax.jit(local_perception_unit)
    out = lpu(x, weight, bias)
    jax.block_until_ready(out)

    assert out.shape == (N, C, H, W)
    ref = _reference(x, weight, bias)
    assert jnp.allclose(out, ref, rtol=1e-5, atol=1e-5), "mismatch vs reference"
    print("KERNEL_OK")
</pallas_src>

<mosaic_0001>
module attributes {stable_mosaic.version = 11 : i64} {
  func.func @lpu_kernel(%arg0: i32, %arg1: memref<1x18x18x128xf32, #tpu.memory_space<vmem>>, %arg2: memref<9x128xf32, #tpu.memory_space<vmem>>, %arg3: memref<1x128xf32, #tpu.memory_space<vmem>>, %arg4: memref<1x16x16x128xf32, #tpu.memory_space<vmem>>) attributes {dimension_semantics = [#tpu.dimension_semantics<parallel>], iteration_bounds = array<i64: 2>, scalar_prefetch = 0 : i64, scratch_operands = 0 : i64, tpu.core_type = #tpu.core_type<tc>, window_params = [{transform_indices = @transform_0, window_bounds = array<i64: 1, 18, 18, 128>}, {pipeline_mode = #tpu.pipeline_mode<synchronous>, transform_indices = @transform_1, window_bounds = array<i64: 9, 128>}, {pipeline_mode = #tpu.pipeline_mode<synchronous>, transform_indices = @transform_2, window_bounds = array<i64: 1, 128>}, {transform_indices = @transform_3, window_bounds = array<i64: 1, 16, 16, 128>}]} {
    %c0 = arith.constant 0 : index
    %c0_0 = arith.constant 0 : index
    %c0_1 = arith.constant 0 : index
    %c0_2 = arith.constant 0 : index
    %0 = vector.load %arg1[%c0, %c0_0, %c0_1, %c0_2] : memref<1x18x18x128xf32, #tpu.memory_space<vmem>>, vector<1x18x18x128xf32>
    %1 = vector.shape_cast %0 : vector<1x18x18x128xf32> to vector<18x18x128xf32>
    %c0_3 = arith.constant 0 : index
    %c0_4 = arith.constant 0 : index
    %2 = vector.load %arg2[%c0_3, %c0_4] : memref<9x128xf32, #tpu.memory_space<vmem>>, vector<9x128xf32>
    %3 = vector.extract_strided_slice %1 {offsets = [1, 1, 0], sizes = [16, 16, 128], strides = [1, 1, 1]} : vector<18x18x128xf32> to vector<16x16x128xf32>
    %c0_5 = arith.constant 0 : index
    %c0_6 = arith.constant 0 : index
    %4 = vector.load %arg3[%c0_5, %c0_6] : memref<1x128xf32, #tpu.memory_space<vmem>>, vector<1x128xf32>
    %5 = vector.shape_cast %4 : vector<1x128xf32> to vector<1x1x128xf32>
    %6 = vector.broadcast %5 : vector<1x1x128xf32> to vector<16x16x128xf32>
    %7 = arith.addf %3, %6 : vector<16x16x128xf32>
    %8 = vector.extract_strided_slice %1 {offsets = [0, 0, 0], sizes = [16, 16, 128], strides = [1, 1, 1]} : vector<18x18x128xf32> to vector<16x16x128xf32>
    %9 = vector.extract_strided_slice %2 {offsets = [0, 0], sizes = [1, 128], strides = [1, 1]} : vector<9x128xf32> to vector<1x128xf32>
    %10 = vector.shape_cast %9 : vector<1x128xf32> to vector<128xf32>
    %11 = vector.shape_cast %10 : vector<128xf32> to vector<1x1x128xf32>
    %12 = vector.broadcast %11 : vector<1x1x128xf32> to vector<16x16x128xf32>
    %13 = arith.mulf %8, %12 : vector<16x16x128xf32>
    %14 = arith.addf %7, %13 : vector<16x16x128xf32>
    %15 = vector.extract_strided_slice %1 {offsets = [0, 1, 0], sizes = [16, 16, 128], strides = [1, 1, 1]} : vector<18x18x128xf32> to vector<16x16x128xf32>
    %16 = vector.extract_strided_slice %2 {offsets = [1, 0], sizes = [1, 128], strides = [1, 1]} : vector<9x128xf32> to vector<1x128xf32>
    %17 = vector.shape_cast %16 : vector<1x128xf32> to vector<128xf32>
    %18 = vector.shape_cast %17 : vector<128xf32> to vector<1x1x128xf32>
    %19 = vector.broadcast %18 : vector<1x1x128xf32> to vector<16x16x128xf32>
    %20 = arith.mulf %15, %19 : vector<16x16x128xf32>
    %21 = arith.addf %14, %20 : vector<16x16x128xf32>
    %22 = vector.extract_strided_slice %1 {offsets = [0, 2, 0], sizes = [16, 16, 128], strides = [1, 1, 1]} : vector<18x18x128xf32> to vector<16x16x128xf32>
    %23 = vector.extract_strided_slice %2 {offsets = [2, 0], sizes = [1, 128], strides = [1, 1]} : vector<9x128xf32> to vector<1x128xf32>
    %24 = vector.shape_cast %23 : vector<1x128xf32> to vector<128xf32>
    %25 = vector.shape_cast %24 : vector<128xf32> to vector<1x1x128xf32>
    %26 = vector.broadcast %25 : vector<1x1x128xf32> to vector<16x16x128xf32>
    %27 = arith.mulf %22, %26 : vector<16x16x128xf32>
    %28 = arith.addf %21, %27 : vector<16x16x128xf32>
    %29 = vector.extract_strided_slice %1 {offsets = [1, 0, 0], sizes = [16, 16, 128], strides = [1, 1, 1]} : vector<18x18x128xf32> to vector<16x16x128xf32>
    %30 = vector.extract_strided_slice %2 {offsets = [3, 0], sizes = [1, 128], strides = [1, 1]} : vector<9x128xf32> to vector<1x128xf32>
    %31 = vector.shape_cast %30 : vector<1x128xf32> to vector<128xf32>
    %32 = vector.shape_cast %31 : vector<128xf32> to vector<1x1x128xf32>
    %33 = vector.broadcast %32 : vector<1x1x128xf32> to vector<16x16x128xf32>
    %34 = arith.mulf %29, %33 : vector<16x16x128xf32>
    %35 = arith.addf %28, %34 : vector<16x16x128xf32>
    %36 = vector.extract_strided_slice %1 {offsets = [1, 1, 0], sizes = [16, 16, 128], strides = [1, 1, 1]} : vector<18x18x128xf32> to vector<16x16x128xf32>
    %37 = vector.extract_strided_slice %2 {offsets = [4, 0], sizes = [1, 128], strides = [1, 1]} : vector<9x128xf32> to vector<1x128xf32>
    %38 = vector.shape_cast %37 : vector<1x128xf32> to vector<128xf32>
    %39 = vector.shape_cast %38 : vector<128xf32> to vector<1x1x128xf32>
    %40 = vector.broadcast %39 : vector<1x1x128xf32> to vector<16x16x128xf32>
    %41 = arith.mulf %36, %40 : vector<16x16x128xf32>
    %42 = arith.addf %35, %41 : vector<16x16x128xf32>
    %43 = vector.extract_strided_slice %1 {offsets = [1, 2, 0], sizes = [16, 16, 128], strides = [1, 1, 1]} : vector<18x18x128xf32> to vector<16x16x128xf32>
    %44 = vector.extract_strided_slice %2 {offsets = [5, 0], sizes = [1, 128], strides = [1, 1]} : vector<9x128xf32> to vector<1x128xf32>
    %45 = vector.shape_cast %44 : vector<1x128xf32> to vector<128xf32>
    %46 = vector.shape_cast %45 : vector<128xf32> to vector<1x1x128xf32>
    %47 = vector.broadcast %46 : vector<1x1x128xf32> to vector<16x16x128xf32>
    %48 = arith.mulf %43, %47 : vector<16x16x128xf32>
    %49 = arith.addf %42, %48 : vector<16x16x128xf32>
    %50 = vector.extract_strided_slice %1 {offsets = [2, 0, 0], sizes = [16, 16, 128], strides = [1, 1, 1]} : vector<18x18x128xf32> to vector<16x16x128xf32>
    %51 = vector.extract_strided_slice %2 {offsets = [6, 0], sizes = [1, 128], strides = [1, 1]} : vector<9x128xf32> to vector<1x128xf32>
    %52 = vector.shape_cast %51 : vector<1x128xf32> to vector<128xf32>
    %53 = vector.shape_cast %52 : vector<128xf32> to vector<1x1x128xf32>
    %54 = vector.broadcast %53 : vector<1x1x128xf32> to vector<16x16x128xf32>
    %55 = arith.mulf %50, %54 : vector<16x16x128xf32>
    %56 = arith.addf %49, %55 : vector<16x16x128xf32>
    %57 = vector.extract_strided_slice %1 {offsets = [2, 1, 0], sizes = [16, 16, 128], strides = [1, 1, 1]} : vector<18x18x128xf32> to vector<16x16x128xf32>
    %58 = vector.extract_strided_slice %2 {offsets = [7, 0], sizes = [1, 128], strides = [1, 1]} : vector<9x128xf32> to vector<1x128xf32>
    %59 = vector.shape_cast %58 : vector<1x128xf32> to vector<128xf32>
    %60 = vector.shape_cast %59 : vector<128xf32> to vector<1x1x128xf32>
    %61 = vector.broadcast %60 : vector<1x1x128xf32> to vector<16x16x128xf32>
    %62 = arith.mulf %57, %61 : vector<16x16x128xf32>
    %63 = arith.addf %56, %62 : vector<16x16x128xf32>
    %64 = vector.extract_strided_slice %1 {offsets = [2, 2, 0], sizes = [16, 16, 128], strides = [1, 1, 1]} : vector<18x18x128xf32> to vector<16x16x128xf32>
    %65 = vector.extract_strided_slice %2 {offsets = [8, 0], sizes = [1, 128], strides = [1, 1]} : vector<9x128xf32> to vector<1x128xf32>
    %66 = vector.shape_cast %65 : vector<1x128xf32> to vector<128xf32>
    %67 = vector.shape_cast %66 : vector<128xf32> to vector<1x1x128xf32>
    %68 = vector.broadcast %67 : vector<1x1x128xf32> to vector<16x16x128xf32>
    %69 = arith.mulf %64, %68 : vector<16x16x128xf32>
    %70 = arith.addf %63, %69 : vector<16x16x128xf32>
    %c0_7 = arith.constant 0 : index
    %c0_8 = arith.constant 0 : index
    %c0_9 = arith.constant 0 : index
    %c0_10 = arith.constant 0 : index
    %71 = vector.load %arg4[%c0_7, %c0_8, %c0_9, %c0_10] : memref<1x16x16x128xf32, #tpu.memory_space<vmem>>, vector<1x16x16x128xf32>
    %72 = vector.shape_cast %71 : vector<1x16x16x128xf32> to vector<16x16x128xf32>
    %73 = vector.shape_cast %70 : vector<16x16x128xf32> to vector<1x16x16x128xf32>
    tpu.vector_store %arg4[%c0_7, %c0_8, %c0_9, %c0_10], %73 {strides = array<i32>} : memref<1x16x16x128xf32, #tpu.memory_space<vmem>>, vector<1x16x16x128xf32>,
    return
  }
  func.func @transform_0(%arg0: i32) -> (i32, i32, i32, i32) {
    %c0_i32 = arith.constant 0 : i32
    %c0_i32_0 = arith.constant 0 : i32
    %c0_i32_1 = arith.constant 0 : i32
    %c0_i32_2 = arith.constant 0 : i32
    return %arg0, %c0_i32, %c0_i32_0, %c0_i32_1 : i32, i32, i32, i32
  }
  func.func @transform_1(%arg0: i32) -> (i32, i32) {
    %c0_i32 = arith.constant 0 : i32
    %c0_i32_0 = arith.constant 0 : i32
    %c0_i32_1 = arith.constant 0 : i32
    return %c0_i32, %c0_i32_0 : i32, i32
  }
  func.func @transform_2(%arg0: i32) -> (i32, i32) {
    %c0_i32 = arith.constant 0 : i32
    %c0_i32_0 = arith.constant 0 : i32
    %c0_i32_1 = arith.constant 0 : i32
    return %c0_i32, %c0_i32_0 : i32, i32
  }
  func.func @transform_3(%arg0: i32) -> (i32, i32, i32, i32) {
    %c0_i32 = arith.constant 0 : i32
    %c0_i32_0 = arith.constant 0 : i32
    %c0_i32_1 = arith.constant 0 : i32
    %c0_i32_2 = arith.constant 0 : i32
    return %arg0, %c0_i32, %c0_i32_0, %c0_i32_1 : i32, i32, i32, i32
  }
}

</mosaic_0001>

<llo_original>
// kernel: local_perception_unit.1
$region0: #{local_perception_unit.1}
  #allocation0 [shape = 'u32[]', space=smem, size = 0x4, offset = 0x4, fixed_abs, tag = 'smem constant byte address 0x4 - core index']
  #allocation1 [shape = 'u32[72,128]{1,0:T(1,128)}', space=vmem, size = 0x9000, scoped, tag = 'internal scratch']
  %s0 = inlined_call_operand.vmem [shape: f32[2,18,18,128], index: 0, kind: input, shape index: {}]
  %s1 = inlined_call_operand.vmem [shape: f32[9,128], index: 1, kind: input, shape index: {}]
  %s2 = inlined_call_operand.vmem [shape: f32[1,128], index: 2, kind: input, shape index: {}]
  %s3 = inlined_call_operand.vmem [shape: f32[2,16,16,128], index: 3, kind: output, shape index: {}]
  %s4 = sld [smem:[#allocation0]]
  $region45: #{local_perception_unit.1} parent=0
    _
  %s6 = ssub.s32 1, %s4
  %s7 = scalar_select 0, %s6, %s4
  loop: start=0, step=1, limit=4
  $region2: #{local_perception_unit.1} parent=0 // loop_pre_header
    _
  $region3: #{local_perception_unit.1} parent=0 // loop_header
    %s9 = sphi 0, %s13
    %p10 = scmp.ge.s32.totalorder %s9, 4
    %s19 = sphi 0, %s21
    %s22 = sphi 0, %s19
    %s23 = sphi 0, %s22
    %s39 = sphi 0, %s23
    %s43 = sphi 0, %s43
    %s45 = sphi 0, %s43
    %s46 = sphi 0, %s45
    %s60 = sphi 0, %s46
    %s64 = sphi 0, %s64
    %s66 = sphi 0, %s64
    %s67 = sphi 0, %s66
    %s81 = sphi 0, %s67
    %s87 = sphi 0, %s89
    %s90 = sphi 0, %s87
    %s91 = sphi 0, %s90
    %s107 = sphi 0, %s91
  $region4: #{local_perception_unit.1} parent=0 // loop_header_branch
    %12 = sbr.rel (%p10) target = $region8
  $region5: #{local_perception_unit.1} parent=0 // loop_body
    %s14 = ssub.s32 %s9, 1
    %s15 = ssub.s32 %s9, 2
    %s16 = sadd.s32 %s9, 1
    %s17 = ssub.s32 %s9, %s16
    %p18 = scmp.eq.s32.totalorder %s17, 0
    %s20 = sadd.s32 %s19, 1
    %s21 = scalar_select %p18, %s19, %s20
    %p24 = pneg %p18
    %p25 = scmp.eq.s32.totalorder %s9, 1
    %p26 = por %p24, %p25
    %p27 = scmp.ne.s32.totalorder %s19, %s22
    %p28 = scmp.eq.s32.totalorder %s9, 0
    %p29 = por %p27, %p28
    %p30 = scmp.ne.s32.totalorder %s19, %s22
    %p31 = scmp.eq.s32.totalorder %s14, 1
    %p32 = por %p30, %p31
    %p33 = scmp.ne.s32.totalorder %s22, %s23
    %p34 = scmp.eq.s32.totalorder %s14, 0
    %p35 = por %p33, %p34
    %p36 = scmp.ne.s32.totalorder %s22, %s23
    %p37 = scmp.eq.s32.totalorder %s15, 1
    %p38 = por %p36, %p37
    %p40 = scmp.ne.s32.totalorder %s23, %s39
    %p41 = scmp.eq.s32.totalorder %s15, 0
    %p42 = por %p40, %p41
    %s44 = sadd.s32 %s43, 1
    %p47 = scmp.eq.s32.totalorder %s9, 1
    %p48 = scmp.ne.s32.totalorder %s43, %s45
    %p49 = scmp.eq.s32.totalorder %s9, 0
    %p50 = por %p48, %p49
    %p51 = scmp.ne.s32.totalorder %s43, %s45
    %p52 = scmp.eq.s32.totalorder %s14, 1
    %p53 = por %p51, %p52
    %p54 = scmp.ne.s32.totalorder %s45, %s46
    %p55 = scmp.eq.s32.totalorder %s14, 0
    %p56 = por %p54, %p55
    %p57 = scmp.ne.s32.totalorder %s45, %s46
    %p58 = scmp.eq.s32.totalorder %s15, 1
    %p59 = por %p57, %p58
    %p61 = scmp.ne.s32.totalorder %s46, %s60
    %p62 = scmp.eq.s32.totalorder %s15, 0
    %p63 = por %p61, %p62
    %s65 = sadd.s32 %s64, 1
    %p68 = scmp.eq.s32.totalorder %s9, 1
    %p69 = scmp.ne.s32.totalorder %s64, %s66
    %p70 = scmp.eq.s32.totalorder %s9, 0
    %p71 = por %p69, %p70
    %p72 = scmp.ne.s32.totalorder %s64, %s66
    %p73 = scmp.eq.s32.totalorder %s14, 1
    %p74 = por %p72, %p73
    %p75 = scmp.ne.s32.totalorder %s66, %s67
    %p76 = scmp.eq.s32.totalorder %s14, 0
    %p77 = por %p75, %p76
    %p78 = scmp.ne.s32.totalorder %s66, %s67
    %p79 = scmp.eq.s32.totalorder %s15, 1
    %p80 = por %p78, %p79
    %p82 = scmp.ne.s32.totalorder %s67, %s81
    %p83 = scmp.eq.s32.totalorder %s15, 0
    %p84 = por %p82, %p83
    %s85 = ssub.s32 %s9, %s16
    %p86 = scmp.eq.s32.totalorder %s85, 0
    %s88 = sadd.s32 %s87, 1
    %s89 = scalar_select %p86, %s87, %s88
    %p92 = pneg %p86
    %p93 = scmp.eq.s32.totalorder %s9, 1
    %p94 = por %p92, %p93
    %p95 = scmp.ne.s32.totalorder %s87, %s90
    %p96 = scmp.eq.s32.totalorder %s9, 0
    %p97 = por %p95, %p96
    %p98 = scmp.ne.s32.totalorder %s87, %s90
    %p99 = scmp.eq.s32.totalorder %s14, 1
    %p100 = por %p98, %p99
    %p101 = scmp.ne.s32.totalorder %s90, %s91
    %p102 = scmp.eq.s32.totalorder %s14, 0
    %p103 = por %p101, %p102
    %p104 = scmp.ne.s32.totalorder %s90, %s91
    %p105 = scmp.eq.s32.totalorder %s15, 1
    %p106 = por %p104, %p105
    %p108 = scmp.ne.s32.totalorder %s91, %s107
    %p109 = scmp.eq.s32.totalorder %s15, 0
    %p110 = por %p108, %p109
    %p111 = scmp.le.s32.totalorder 1, %s9
    %p112 = scmp.lt.s32.totalorder %s9, 3
    %p113 = pnand %p111, %p112
    %p114 = pneg %p113
    // Predicated region
    $region9: #{local_perception_unit.1} parent=5 // pred_check
      _
    $region10: #{local_perception_unit.1} parent=5 // pred_check_branch
      %116 = sbr.rel (%p113) target = $region12
    $region11: #{local_perception_unit.1} parent=5 // pred_region
      %s117 = ssub.s32 %s9, 1
      // Predicated region
      $region13: #{local_perception_unit.1} parent=11 // pred_check
        %p118 = pneg %p56
      $region14: #{local_perception_unit.1} parent=11 // pred_check_branch
        %120 = sbr.rel (%p118) target = $region16
      $region15: #{local_perception_unit.1} parent=11 // pred_region
        _
      $region16: #{local_perception_unit.1} parent=11 // pred_fallthru
        _
      // Predicated region
      $region17: #{local_perception_unit.1} parent=11 // pred_check
        %p121 = pneg %p77
      $region18: #{local_perception_unit.1} parent=11 // pred_check_branch
        %123 = sbr.rel (%p121) target = $region20
      $region19: #{local_perception_unit.1} parent=11 // pred_region
        _
      $region20: #{local_perception_unit.1} parent=11 // pred_fallthru
        _
    $region12: #{local_perception_unit.1} parent=5 // pred_fallthru
      _
    %p124 = scmp.lt.s32.totalorder %s9, 2
    // Predicated region
    $region21: #{local_perception_unit.1} parent=5 // pred_check
      %p125 = pneg %p124
    $region22: #{local_perception_unit.1} parent=5 // pred_check_branch
      %127 = sbr.rel (%p125) target = $region24
    $region23: #{local_perception_unit.1} parent=5 // pred_region
      // Predicated region
      $region25: #{local_perception_unit.1} parent=23 // pred_check
        %p128 = pneg %p29
      $region26: #{local_perception_unit.1} parent=23 // pred_check_branch
        %130 = sbr.rel (%p128) target = $region28
      $region27: #{local_perception_unit.1} parent=23 // pred_region
        %p131 = scmp.lt.s32.totalorder %s9, 1
        %s132 = scalar_select %p131, %s9, 1
        %s133 = smul.addr %s132, 54
        %s134 = smul.addr %s133, 8
        %s135 = scalar_lea.vmem %s0, %s134
      $region28: #{local_perception_unit.1} parent=23 // pred_fallthru
        _
    $region24: #{local_perception_unit.1} parent=5 // pred_fallthru
      _
    %p136 = scmp.le.s32.totalorder 1, %s9
    %p137 = scmp.lt.s32.totalorder %s9, 3
    %p138 = pnand %p136, %p137
    %p139 = pneg %p138
    // Predicated region
    $region29: #{local_perception_unit.1} parent=5 // pred_check
      _
    $region30: #{local_perception_unit.1} parent=5 // pred_check_branch
      %141 = sbr.rel (%p138) target = $region32
    $region31: #{local_perception_unit.1} parent=5 // pred_region
      %s142 = ssub.s32 %s9, 1
      %p143 = scmp.lt.s32.totalorder %s14, 1
      %s144 = scalar_select %p143, %s14, 1
      %s145 = smul.addr %s144, 54
      %s146 = smul.addr %s145, 8
      %s147 = scalar_lea.vmem %s0, %s146
      %p148 = pneg %p35
      %p149 = pneg %p32
      %p150 = pneg %p56
      %p151 = pneg %p53
      %p152 = pneg %p77
      %p153 = pneg %p74
      %p154 = pneg %p103
      %p155 = pneg %p100
      %p156 = scmp.lt.s32.totalorder %s14, 1
      %s157 = scalar_select %p156, %s14, 1
      %s158 = smul.addr %s157, 32
      %s159 = smul.addr %s158, 8
      %s160 = scalar_lea.vmem %s3, %s159
      %p161 = scmp.lt.s32.totalorder %s14, 1
      %s162 = scalar_select %p161, %s14, 1
      %s163 = smul.addr %s162, 54
      %s164 = smul.addr %s163, 8
      %s165 = scalar_lea.vmem %s0, %s164
      %p166 = scmp.lt.s32.totalorder %s14, 1
      %s167 = scalar_select %p166, %s14, 1
      %s168 = smul.addr %s167, 32
      %s169 = smul.addr %s168, 8
      %s170 = scalar_lea.vmem %s3, %s169
      %v171 = vld [vmem:[%s165] sm:$0xff]
      %v172 = vld [vmem:[%s165 + $0x8] sm:$0xff]
      %v173 = vld [vmem:[%s165 + $0x10] sm:$0x3]
      %v174 = vld [vmem:[%s165 + $0x18] sm:$0xff]
      %v175 = vld [vmem:[%s165 + $0x20] sm:$0xff]
      %v176 = vld [vmem:[%s165 + $0x28] sm:$0x3]
      %v177 = vld [vmem:[%s165 + $0x30] sm:$0xff]
      %v178 = vld [vmem:[%s165 + $0x38] sm:$0xff]
      %v179 = vld [vmem:[%s165 + $0x40] sm:$0x3]
      %v180 = vld [vmem:[%s165 + $0x48] sm:$0xff]
      %v181 = vld [vmem:[%s165 + $0x50] sm:$0xff]
      %v182 = vld [vmem:[%s165 + $0x58] sm:$0x3]
      %v183 = vld [vmem:[%s165 + $0x60] sm:$0xff]
      %v184 = vld [vmem:[%s165 + $0x68] sm:$0xff]
      %v185 = vld [vmem:[%s165 + $0x70] sm:$0x3]
      %v186 = vld [vmem:[%s165 + $0x78] sm:$0xff]
      %v187 = vld [vmem:[%s165 + $0x80] sm:$0xff]
      %v188 = vld [vmem:[%s165 + $0x88] sm:$0x3]
      %v189 = vld [vmem:[%s165 + $0x90] sm:$0xff]
      %v190 = vld [vmem:[%s165 + $0x98] sm:$0xff]
      %v191 = vld [vmem:[%s165 + $0xa0] sm:$0x3]
      %v192 = vld [vmem:[%s165 + $0xa8] sm:$0xff]
      %v193 = vld [vmem:[%s165 + $0xb0] sm:$0xff]
      %v194 = vld [vmem:[%s165 + $0xb8] sm:$0x3]
      %v195 = vld [vmem:[%s165 + $0xc0] sm:$0xff]
      %v196 = vld [vmem:[%s165 + $0xc8] sm:$0xff]
      %v197 = vld [vmem:[%s165 + $0xd0] sm:$0x3]
      %v198 = vld [vmem:[%s165 + $0xd8] sm:$0xff]
      %v199 = vld [vmem:[%s165 + $0xe0] sm:$0xff]
      %v200 = vld [vmem:[%s165 + $0xe8] sm:$0x3]
      %v201 = vld [vmem:[%s165 + $0xf0] sm:$0xff]
      %v202 = vld [vmem:[%s165 + $0xf8] sm:$0xff]
      %v203 = vld [vmem:[%s165 + $0x100] sm:$0x3]
      %v204 = vld [vmem:[%s165 + $0x108] sm:$0xff]
      %v205 = vld [vmem:[%s165 + $0x110] sm:$0xff]
      %v206 = vld [vmem:[%s165 + $0x118] sm:$0x3]
      %v207 = vld [vmem:[%s165 + $0x120] sm:$0xff]
      %v208 = vld [vmem:[%s165 + $0x128] sm:$0xff]
      %v209 = vld [vmem:[%s165 + $0x130] sm:$0x3]
      %v210 = vld [vmem:[%s165 + $0x138] sm:$0xff]
      %v211 = vld [vmem:[%s165 + $0x140] sm:$0xff]
      %v212 = vld [vmem:[%s165 + $0x148] sm:$0x3]
      %v213 = vld [vmem:[%s165 + $0x150] sm:$0xff]
      %v214 = vld [vmem:[%s165 + $0x158] sm:$0xff]
      %v215 = vld [vmem:[%s165 + $0x160] sm:$0x3]
      %v216 = vld [vmem:[%s165 + $0x168] sm:$0xff]
      %v217 = vld [vmem:[%s165 + $0x170] sm:$0xff]
      %v218 = vld [vmem:[%s165 + $0x178] sm:$0x3]
      %v219 = vld [vmem:[%s165 + $0x180] sm:$0xff]
      %v220 = vld [vmem:[%s165 + $0x188] sm:$0xff]
      %v221 = vld [vmem:[%s165 + $0x190] sm:$0x3]
      %v222 = vld [vmem:[%s165 + $0x198] sm:$0xff]
      %v223 = vld [vmem:[%s165 + $0x1a0] sm:$0xff]
      %v224 = vld [vmem:[%s165 + $0x1a8] sm:$0x3]
      %v225 = vld [vmem:[%s1] sm:$0xff]
      %v226 = vld [vmem:[%s1 + $0x8] sm:$0x1]
      %v227 = vld [vmem:[%s2] sm:$0x1]
      %v229 = vperm.slane %v227, 0
      %v231 = vadd.f32 %v174, %v229
      %v232 = vadd.f32 %v175, %v229
      %v233 = vadd.f32 %v176, %v229
      %v234 = vadd.f32 %v177, %v229
      %v235 = vadd.f32 %v178, %v229
      %v236 = vadd.f32 %v179, %v229
      %v237 = vadd.f32 %v180, %v229
      %v238 = vadd.f32 %v181, %v229
      %v239 = vadd.f32 %v182, %v229
      %v240 = vadd.f32 %v183, %v229
      %v241 = vadd.f32 %v184, %v229
      %v242 = vadd.f32 %v185, %v229
      %v243 = vadd.f32 %v186, %v229
      %v244 = vadd.f32 %v187, %v229
      %v245 = vadd.f32 %v188, %v229
      %v246 = vadd.f32 %v189, %v229
      %v247 = vadd.f32 %v190, %v229
      %v248 = vadd.f32 %v191, %v229
      %v249 = vadd.f32 %v192, %v229
      %v250 = vadd.f32 %v193, %v229
      %v251 = vadd.f32 %v194, %v229
      %v252 = vadd.f32 %v195, %v229
      %v253 = vadd.f32 %v196, %v229
      %v254 = vadd.f32 %v197, %v229
      %v255 = vadd.f32 %v198, %v229
      %v256 = vadd.f32 %v199, %v229
      %v257 = vadd.f32 %v200, %v229
      %v258 = vadd.f32 %v201, %v229
      %v259 = vadd.f32 %v202, %v229
      %v260 = vadd.f32 %v203, %v229
      %v261 = vadd.f32 %v204, %v229
      %v262 = vadd.f32 %v205, %v229
      %v263 = vadd.f32 %v206, %v229
      %v264 = vadd.f32 %v207, %v229
      %v265 = vadd.f32 %v208, %v229
      %v266 = vadd.f32 %v209, %v229
      %v267 = vadd.f32 %v210, %v229
      %v268 = vadd.f32 %v211, %v229
      %v269 = vadd.f32 %v212, %v229
      %v270 = vadd.f32 %v213, %v229
      %v271 = vadd.f32 %v214, %v229
      %v272 = vadd.f32 %v215, %v229
      %v273 = vadd.f32 %v216, %v229
      %v274 = vadd.f32 %v217, %v229
      %v275 = vadd.f32 %v218, %v229
      %v276 = vadd.f32 %v219, %v229
      %v277 = vadd.f32 %v220, %v229
      %v278 = vadd.f32 %v221, %v229
      %v279 = vperm.slane %v225, 0
      %v280 = vmul.f32 %v171, %v279
      %v281 = vmul.f32 %v172, %v279
      %v282 = vmul.f32 %v174, %v279
      %v283 = vmul.f32 %v175, %v279
      %v284 = vmul.f32 %v177, %v279
      %v285 = vmul.f32 %v178, %v279
      %v286 = vmul.f32 %v180, %v279
      %v287 = vmul.f32 %v181, %v279
      %v288 = vmul.f32 %v183, %v279
      %v289 = vmul.f32 %v184, %v279
      %v290 = vmul.f32 %v186, %v279
      %v291 = vmul.f32 %v187, %v279
      %v292 = vmul.f32 %v189, %v279
      %v293 = vmul.f32 %v190, %v279
      %v294 = vmul.f32 %v192, %v279
      %v295 = vmul.f32 %v193, %v279
      %v296 = vmul.f32 %v195, %v279
      %v297 = vmul.f32 %v196, %v279
      %v298 = vmul.f32 %v198, %v279
      %v299 = vmul.f32 %v199, %v279
      %v300 = vmul.f32 %v201, %v279
      %v301 = vmul.f32 %v202, %v279
      %v302 = vmul.f32 %v204, %v279
      %v303 = vmul.f32 %v205, %v279
      %v304 = vmul.f32 %v207, %v279
      %v305 = vmul.f32 %v208, %v279
      %v306 = vmul.f32 %v210, %v279
      %v307 = vmul.f32 %v211, %v279
      %v308 = vmul.f32 %v213, %v279
      %v309 = vmul.f32 %v214, %v279
      %v310 = vmul.f32 %v216, %v279
      %v311 = vmul.f32 %v217, %v279
      %vm344 = vcmask 1040384
      %v345 = vrot.slane %v280, 7
      %v346 = vrot.slane %v281, 7
      %v347 = vsel %vm344, %v345, %v346
      %v348 = vrot.slane %v282, 7
      %v349 = vrot.slane %v283, 7
      %v350 = vsel %vm344, %v348, %v349
      %v351 = vrot.slane %v284, 7
      %v352 = vrot.slane %v285, 7
      %v353 = vsel %vm344, %v351, %v352
      %v354 = vrot.slane %v286, 7
      %v355 = vrot.slane %v287, 7
      %v356 = vsel %vm344, %v354, %v355
      %v357 = vrot.slane %v288, 7
      %v358 = vrot.slane %v289, 7
      %v359 = vsel %vm344, %v357, %v358
      %v360 = vrot.slane %v290, 7
      %v361 = vrot.slane %v291, 7
      %v362 = vsel %vm344, %v360, %v361
      %v363 = vrot.slane %v292, 7
      %v364 = vrot.slane %v293, 7
      %v365 = vsel %vm344, %v363, %v364
      %v366 = vrot.slane %v294, 7
      %v367 = vrot.slane %v295, 7
      %v368 = vsel %vm344, %v366, %v367
      %v369 = vrot.slane %v296, 7
      %v370 = vrot.slane %v297, 7
      %v371 = vsel %vm344, %v369, %v370
      %v372 = vrot.slane %v298, 7
      %v373 = vrot.slane %v299, 7
      %v374 = vsel %vm344, %v372, %v373
      %v375 = vrot.slane %v300, 7
      %v376 = vrot.slane %v301, 7
      %v377 = vsel %vm344, %v375, %v376
      %v378 = vrot.slane %v302, 7
      %v379 = vrot.slane %v303, 7
      %v380 = vsel %vm344, %v378, %v379
      %v381 = vrot.slane %v304, 7
      %v382 = vrot.slane %v305, 7
      %v383 = vsel %vm344, %v381, %v382
      %v384 = vrot.slane %v306, 7
      %v385 = vrot.slane %v307, 7
      %v386 = vsel %vm344, %v384, %v385
      %v387 = vrot.slane %v308, 7
      %v388 = vrot.slane %v309, 7
      %v389 = vsel %vm344, %v387, %v388
      %v390 = vrot.slane %v310, 7
      %v391 = vrot.slane %v311, 7
      %v392 = vsel %vm344, %v390, %v391
      %v441 = vadd.f32 %v231, %v345
      %v442 = vadd.f32 %v232, %v347
      %v443 = vadd.f32 %v233, %v346
      %v444 = vadd.f32 %v234, %v348
      %v445 = vadd.f32 %v235, %v350
      %v446 = vadd.f32 %v236, %v349
      %v447 = vadd.f32 %v237, %v351
      %v448 = vadd.f32 %v238, %v353
      %v449 = vadd.f32 %v239, %v352
      %v450 = vadd.f32 %v240, %v354
      %v451 = vadd.f32 %v241, %v356
      %v452 = vadd.f32 %v242, %v355
      %v453 = vadd.f32 %v243, %v357
      %v454 = vadd.f32 %v244, %v359
      %v455 = vadd.f32 %v245, %v358
      %v456 = vadd.f32 %v246, %v360
      %v457 = vadd.f32 %v247, %v362
      %v458 = vadd.f32 %v248, %v361
      %v459 = vadd.f32 %v249, %v363
      %v460 = vadd.f32 %v250, %v365
      %v461 = vadd.f32 %v251, %v364
      %v462 = vadd.f32 %v252, %v366
      %v463 = vadd.f32 %v253, %v368
      %v464 = vadd.f32 %v254, %v367
      %v465 = vadd.f32 %v255, %v369
      %v466 = vadd.f32 %v256, %v371
      %v467 = vadd.f32 %v257, %v370
      %v468 = vadd.f32 %v258, %v372
      %v469 = vadd.f32 %v259, %v374
      %v470 = vadd.f32 %v260, %v373
      %v471 = vadd.f32 %v261, %v375
      %v472 = vadd.f32 %v262, %v377
      %v473 = vadd.f32 %v263, %v376
      %v474 = vadd.f32 %v264, %v378
      %v475 = vadd.f32 %v265, %v380
      %v476 = vadd.f32 %v266, %v379
      %v477 = vadd.f32 %v267, %v381
      %v478 = vadd.f32 %v268, %v383
      %v479 = vadd.f32 %v269, %v382
      %v480 = vadd.f32 %v270, %v384
      %v481 = vadd.f32 %v271, %v386
      %v482 = vadd.f32 %v272, %v385
      %v483 = vadd.f32 %v273, %v387
      %v484 = vadd.f32 %v274, %v389
      %v485 = vadd.f32 %v275, %v388
      %v486 = vadd.f32 %v276, %v390
      %v487 = vadd.f32 %v277, %v392
      %v488 = vadd.f32 %v278, %v391
      %v489 = vperm.slane %v225, 1
      %v490 = vmul.f32 %v171, %v489
      %v491 = vmul.f32 %v172, %v489
      %v492 = vmul.f32 %v173, %v489
      %v493 = vmul.f32 %v174, %v489
      %v494 = vmul.f32 %v175, %v489
      %v495 = vmul.f32 %v176, %v489
      %v496 = vmul.f32 %v177, %v489
      %v497 = vmul.f32 %v178, %v489
      %v498 = vmul.f32 %v179, %v489
      %v499 = vmul.f32 %v180, %v489
      %v500 = vmul.f32 %v181, %v489
      %v501 = vmul.f32 %v182, %v489
      %v502 = vmul.f32 %v183, %v489
      %v503 = vmul.f32 %v184, %v489
      %v504 = vmul.f32 %v185, %v489
      %v505 = vmul.f32 %v186, %v489
      %v506 = vmul.f32 %v187, %v489
      %v507 = vmul.f32 %v188, %v489
      %v508 = vmul.f32 %v189, %v489
      %v509 = vmul.f32 %v190, %v489
      %v510 = vmul.f32 %v191, %v489
      %v511 = vmul.f32 %v192, %v489
      %v512 = vmul.f32 %v193, %v489
      %v513 = vmul.f32 %v194, %v489
      %v514 = vmul.f32 %v195, %v489
      %v515 = vmul.f32 %v196, %v489
      %v516 = vmul.f32 %v197, %v489
      %v517 = vmul.f32 %v198, %v489
      %v518 = vmul.f32 %v199, %v489
      %v519 = vmul.f32 %v200, %v489
      %v520 = vmul.f32 %v201, %v489
      %v521 = vmul.f32 %v202, %v489
      %v522 = vmul.f32 %v203, %v489
      %v523 = vmul.f32 %v204, %v489
      %v524 = vmul.f32 %v205, %v489
      %v525 = vmul.f32 %v206, %v489
      %v526 = vmul.f32 %v207, %v489
      %v527 = vmul.f32 %v208, %v489
      %v528 = vmul.f32 %v209, %v489
      %v529 = vmul.f32 %v210, %v489
      %v530 = vmul.f32 %v211, %v489
      %v531 = vmul.f32 %v212, %v489
      %v532 = vmul.f32 %v213, %v489
      %v533 = vmul.f32 %v214, %v489
      %v534 = vmul.f32 %v215, %v489
      %v535 = vmul.f32 %v216, %v489
      %v536 = vmul.f32 %v217, %v489
      %v537 = vmul.f32 %v218, %v489
      %v538 = vadd.f32 %v441, %v490
      %v539 = vadd.f32 %v442, %v491
      %v540 = vadd.f32 %v443, %v492
      %v541 = vadd.f32 %v444, %v493
      %v542 = vadd.f32 %v445, %v494
      %v543 = vadd.f32 %v446, %v495
      %v544 = vadd.f32 %v447, %v496
      %v545 = vadd.f32 %v448, %v497
      %v546 = vadd.f32 %v449, %v498
      %v547 = vadd.f32 %v450, %v499
      %v548 = vadd.f32 %v451, %v500
      %v549 = vadd.f32 %v452, %v501
      %v550 = vadd.f32 %v453, %v502
      %v551 = vadd.f32 %v454, %v503
      %v552 = vadd.f32 %v455, %v504
      %v553 = vadd.f32 %v456, %v505
      %v554 = vadd.f32 %v457, %v506
      %v555 = vadd.f32 %v458, %v507
      %v556 = vadd.f32 %v459, %v508
      %v557 = vadd.f32 %v460, %v509
      %v558 = vadd.f32 %v461, %v510
      %v559 = vadd.f32 %v462, %v511
      %v560 = vadd.f32 %v463, %v512
      %v561 = vadd.f32 %v464, %v513
      %v562 = vadd.f32 %v465, %v514
      %v563 = vadd.f32 %v466, %v515
      %v564 = vadd.f32 %v467, %v516
      %v565 = vadd.f32 %v468, %v517
      %v566 = vadd.f32 %v469, %v518
      %v567 = vadd.f32 %v470, %v519
      %v568 = vadd.f32 %v471, %v520
      %v569 = vadd.f32 %v472, %v521
      %v570 = vadd.f32 %v473, %v522
      %v571 = vadd.f32 %v474, %v523
      %v572 = vadd.f32 %v475, %v524
      %v573 = vadd.f32 %v476, %v525
      %v574 = vadd.f32 %v477, %v526
      %v575 = vadd.f32 %v478, %v527
      %v576 = vadd.f32 %v479, %v528
      %v577 = vadd.f32 %v480, %v529
      %v578 = vadd.f32 %v481, %v530
      %v579 = vadd.f32 %v482, %v531
      %v580 = vadd.f32 %v483, %v532
      %v581 = vadd.f32 %v484, %v533
      %v582 = vadd.f32 %v485, %v534
      %v583 = vadd.f32 %v486, %v535
      %v584 = vadd.f32 %v487, %v536
      %v585 = vadd.f32 %v488, %v537
      %v586 = vperm.slane %v225, 2
      %v587 = vmul.f32 %v171, %v586
      %v588 = vmul.f32 %v172, %v586
      %v589 = vmul.f32 %v173, %v586
      %v590 = vmul.f32 %v174, %v586
      %v591 = vmul.f32 %v175, %v586
      %v592 = vmul.f32 %v176, %v586
      %v593 = vmul.f32 %v177, %v586
      %v594 = vmul.f32 %v178, %v586
      %v595 = vmul.f32 %v179, %v586
      %v596 = vmul.f32 %v180, %v586
      %v597 = vmul.f32 %v181, %v586
      %v598 = vmul.f32 %v182, %v586
      %v599 = vmul.f32 %v183, %v586
      %v600 = vmul.f32 %v184, %v586
      %v601 = vmul.f32 %v185, %v586
      %v602 = vmul.f32 %v186, %v586
      %v603 = vmul.f32 %v187, %v586
      %v604 = vmul.f32 %v188, %v586
      %v605 = vmul.f32 %v189, %v586
      %v606 = vmul.f32 %v190, %v586
      %v607 = vmul.f32 %v191, %v586
      %v608 = vmul.f32 %v192, %v586
      %v609 = vmul.f32 %v193, %v586
      %v610 = vmul.f32 %v194, %v586
      %v611 = vmul.f32 %v195, %v586
      %v612 = vmul.f32 %v196, %v586
      %v613 = vmul.f32 %v197, %v586
      %v614 = vmul.f32 %v198, %v586
      %v615 = vmul.f32 %v199, %v586
      %v616 = vmul.f32 %v200, %v586
      %v617 = vmul.f32 %v201, %v586
      %v618 = vmul.f32 %v202, %v586
      %v619 = vmul.f32 %v203, %v586
      %v620 = vmul.f32 %v204, %v586
      %v621 = vmul.f32 %v205, %v586
      %v622 = vmul.f32 %v206, %v586
      %v623 = vmul.f32 %v207, %v586
      %v624 = vmul.f32 %v208, %v586
      %v625 = vmul.f32 %v209, %v586
      %v626 = vmul.f32 %v210, %v586
      %v627 = vmul.f32 %v211, %v586
      %v628 = vmul.f32 %v212, %v586
      %v629 = vmul.f32 %v213, %v586
      %v630 = vmul.f32 %v214, %v586
      %v631 = vmul.f32 %v215, %v586
      %v632 = vmul.f32 %v216, %v586
      %v633 = vmul.f32 %v217, %v586
      %v634 = vmul.f32 %v218, %v586
      %vm683 = vcmask 1046528
      %v684 = vrot.slane %v587, 1
      %v685 = vrot.slane %v588, 1
      %v686 = vsel %vm683, %v684, %v685
      %v687 = vrot.slane %v589, 1
      %v688 = vsel %vm683, %v685, %v687
      %v689 = vrot.slane %v590, 1
      %v690 = vrot.slane %v591, 1
      %v691 = vsel %vm683, %v689, %v690
      %v692 = vrot.slane %v592, 1
      %v693 = vsel %vm683, %v690, %v692
      %v694 = vrot.slane %v593, 1
      %v695 = vrot.slane %v594, 1
      %v696 = vsel %vm683, %v694, %v695
      %v697 = vrot.slane %v595, 1
      %v698 = vsel %vm683, %v695, %v697
      %v699 = vrot.slane %v596, 1
      %v700 = vrot.slane %v597, 1
      %v701 = vsel %vm683, %v699, %v700
      %v702 = vrot.slane %v598, 1
      %v703 = vsel %vm683, %v700, %v702
      %v704 = vrot.slane %v599, 1
      %v705 = vrot.slane %v600, 1
      %v706 = vsel %vm683, %v704, %v705
      %v707 = vrot.slane %v601, 1
      %v708 = vsel %vm683, %v705, %v707
      %v709 = vrot.slane %v602, 1
      %v710 = vrot.slane %v603, 1
      %v711 = vsel %vm683, %v709, %v710
      %v712 = vrot.slane %v604, 1
      %v713 = vsel %vm683, %v710, %v712
      %v714 = vrot.slane %v605, 1
      %v715 = vrot.slane %v606, 1
      %v716 = vsel %vm683, %v714, %v715
      %v717 = vrot.slane %v607, 1
      %v718 = vsel %vm683, %v715, %v717
      %v719 = vrot.slane %v608, 1
      %v720 = vrot.slane %v609, 1
      %v721 = vsel %vm683, %v719, %v720
      %v722 = vrot.slane %v610, 1
      %v723 = vsel %vm683, %v720, %v722
      %v724 = vrot.slane %v611, 1
      %v725 = vrot.slane %v612, 1
      %v726 = vsel %vm683, %v724, %v725
      %v727 = vrot.slane %v613, 1
      %v728 = vsel %vm683, %v725, %v727
      %v729 = vrot.slane %v614, 1
      %v730 = vrot.slane %v615, 1
      %v731 = vsel %vm683, %v729, %v730
      %v732 = vrot.slane %v616, 1
      %v733 = vsel %vm683, %v730, %v732
      %v734 = vrot.slane %v617, 1
      %v735 = vrot.slane %v618, 1
      %v736 = vsel %vm683, %v734, %v735
      %v737 = vrot.slane %v619, 1
      %v738 = vsel %vm683, %v735, %v737
      %v739 = vrot.slane %v620, 1
      %v740 = vrot.slane %v621, 1
      %v741 = vsel %vm683, %v739, %v740
      %v742 = vrot.slane %v622, 1
      %v743 = vsel %vm683, %v740, %v742
      %v744 = vrot.slane %v623, 1
      %v745 = vrot.slane %v624, 1
      %v746 = vsel %vm683, %v744, %v745
      %v747 = vrot.slane %v625, 1
      %v748 = vsel %vm683, %v745, %v747
      %v749 = vrot.slane %v626, 1
      %v750 = vrot.slane %v627, 1
      %v751 = vsel %vm683, %v749, %v750
      %v752 = vrot.slane %v628, 1
      %v753 = vsel %vm683, %v750, %v752
      %v754 = vrot.slane %v629, 1
      %v755 = vrot.slane %v630, 1
      %v756 = vsel %vm683, %v754, %v755
      %v757 = vrot.slane %v631, 1
      %v758 = vsel %vm683, %v755, %v757
      %v759 = vrot.slane %v632, 1
      %v760 = vrot.slane %v633, 1
      %v761 = vsel %vm683, %v759, %v760
      %v762 = vrot.slane %v634, 1
      %v763 = vsel %vm683, %v760, %v762
      %v812 = vadd.f32 %v538, %v686
      %v813 = vadd.f32 %v539, %v688
      %v814 = vadd.f32 %v540, %v687
      %v815 = vadd.f32 %v541, %v691
      %v816 = vadd.f32 %v542, %v693
      %v817 = vadd.f32 %v543, %v692
      %v818 = vadd.f32 %v544, %v696
      %v819 = vadd.f32 %v545, %v698
      %v820 = vadd.f32 %v546, %v697
      %v821 = vadd.f32 %v547, %v701
      %v822 = vadd.f32 %v548, %v703
      %v823 = vadd.f32 %v549, %v702
      %v824 = vadd.f32 %v550, %v706
      %v825 = vadd.f32 %v551, %v708
      %v826 = vadd.f32 %v552, %v707
      %v827 = vadd.f32 %v553, %v711
      %v828 = vadd.f32 %v554, %v713
      %v829 = vadd.f32 %v555, %v712
      %v830 = vadd.f32 %v556, %v716
      %v831 = vadd.f32 %v557, %v718
      %v832 = vadd.f32 %v558, %v717
      %v833 = vadd.f32 %v559, %v721
      %v834 = vadd.f32 %v560, %v723
      %v835 = vadd.f32 %v561, %v722
      %v836 = vadd.f32 %v562, %v726
      %v837 = vadd.f32 %v563, %v728
      %v838 = vadd.f32 %v564, %v727
      %v839 = vadd.f32 %v565, %v731
      %v840 = vadd.f32 %v566, %v733
      %v841 = vadd.f32 %v567, %v732
      %v842 = vadd.f32 %v568, %v736
      %v843 = vadd.f32 %v569, %v738
      %v844 = vadd.f32 %v570, %v737
      %v845 = vadd.f32 %v571, %v741
      %v846 = vadd.f32 %v572, %v743
      %v847 = vadd.f32 %v573, %v742
      %v848 = vadd.f32 %v574, %v746
      %v849 = vadd.f32 %v575, %v748
      %v850 = vadd.f32 %v576, %v747
      %v851 = vadd.f32 %v577, %v751
      %v852 = vadd.f32 %v578, %v753
      %v853 = vadd.f32 %v579, %v752
      %v854 = vadd.f32 %v580, %v756
      %v855 = vadd.f32 %v581, %v758
      %v856 = vadd.f32 %v582, %v757
      %v857 = vadd.f32 %v583, %v761
      %v858 = vadd.f32 %v584, %v763
      %v859 = vadd.f32 %v585, %v762
      %v860 = vperm.slane %v225, 3
      %v861 = vmul.f32 %v174, %v860
      %v862 = vmul.f32 %v175, %v860
      %v863 = vmul.f32 %v177, %v860
      %v864 = vmul.f32 %v178, %v860
      %v865 = vmul.f32 %v180, %v860
      %v866 = vmul.f32 %v181, %v860
      %v867 = vmul.f32 %v183, %v860
      %v868 = vmul.f32 %v184, %v860
      %v869 = vmul.f32 %v186, %v860
      %v870 = vmul.f32 %v187, %v860
      %v871 = vmul.f32 %v189, %v860
      %v872 = vmul.f32 %v190, %v860
      %v873 = vmul.f32 %v192, %v860
      %v874 = vmul.f32 %v193, %v860
      %v875 = vmul.f32 %v195, %v860
      %v876 = vmul.f32 %v196, %v860
      %v877 = vmul.f32 %v198, %v860
      %v878 = vmul.f32 %v199, %v860
      %v879 = vmul.f32 %v201, %v860
      %v880 = vmul.f32 %v202, %v860
      %v881 = vmul.f32 %v204, %v860
      %v882 = vmul.f32 %v205, %v860
      %v883 = vmul.f32 %v207, %v860
      %v884 = vmul.f32 %v208, %v860
      %v885 = vmul.f32 %v210, %v860
      %v886 = vmul.f32 %v211, %v860
      %v887 = vmul.f32 %v213, %v860
      %v888 = vmul.f32 %v214, %v860
      %v889 = vmul.f32 %v216, %v860
      %v890 = vmul.f32 %v217, %v860
      %v891 = vmul.f32 %v219, %v860
      %v892 = vmul.f32 %v220, %v860
      %v925 = vrot.slane %v861, 7
      %v926 = vrot.slane %v862, 7
      %v927 = vsel %vm344, %v925, %v926
      %v928 = vrot.slane %v863, 7
      %v929 = vrot.slane %v864, 7
      %v930 = vsel %vm344, %v928, %v929
      %v931 = vrot.slane %v865, 7
      %v932 = vrot.slane %v866, 7
      %v933 = vsel %vm344, %v931, %v932
      %v934 = vrot.slane %v867, 7
      %v935 = vrot.slane %v868, 7
      %v936 = vsel %vm344, %v934, %v935
      %v937 = vrot.slane %v869, 7
      %v938 = vrot.slane %v870, 7
      %v939 = vsel %vm344, %v937, %v938
      %v940 = vrot.slane %v871, 7
      %v941 = vrot.slane %v872, 7
      %v942 = vsel %vm344, %v940, %v941
      %v943 = vrot.slane %v873, 7
      %v944 = vrot.slane %v874, 7
      %v945 = vsel %vm344, %v943, %v944
      %v946 = vrot.slane %v875, 7
      %v947 = vrot.slane %v876, 7
      %v948 = vsel %vm344, %v946, %v947
      %v949 = vrot.slane %v877, 7
      %v950 = vrot.slane %v878, 7
      %v951 = vsel %vm344, %v949, %v950
      %v952 = vrot.slane %v879, 7
      %v953 = vrot.slane %v880, 7
      %v954 = vsel %vm344, %v952, %v953
      %v955 = vrot.slane %v881, 7
      %v956 = vrot.slane %v882, 7
      %v957 = vsel %vm344, %v955, %v956
      %v958 = vrot.slane %v883, 7
      %v959 = vrot.slane %v884, 7
      %v960 = vsel %vm344, %v958, %v959
      %v961 = vrot.slane %v885, 7
      %v962 = vrot.slane %v886, 7
      %v963 = vsel %vm344, %v961, %v962
      %v964 = vrot.slane %v887, 7
      %v965 = vrot.slane %v888, 7
      %v966 = vsel %vm344, %v964, %v965
      %v967 = vrot.slane %v889, 7
      %v968 = vrot.slane %v890, 7
      %v969 = vsel %vm344, %v967, %v968
      %v970 = vrot.slane %v891, 7
      %v971 = vrot.slane %v892, 7
      %v972 = vsel %vm344, %v970, %v971
      %v1021 = vadd.f32 %v812, %v925
      %v1022 = vadd.f32 %v813, %v927
      %v1023 = vadd.f32 %v814, %v926
      %v1024 = vadd.f32 %v815, %v928
      %v1025 = vadd.f32 %v816, %v930
      %v1026 = vadd.f32 %v817, %v929
      %v1027 = vadd.f32 %v818, %v931
      %v1028 = vadd.f32 %v819, %v933
      %v1029 = vadd.f32 %v820, %v932
      %v1030 = vadd.f32 %v821, %v934
      %v1031 = vadd.f32 %v822, %v936
      %v1032 = vadd.f32 %v823, %v935
      %v1033 = vadd.f32 %v824, %v937
      %v1034 = vadd.f32 %v825, %v939
      %v1035 = vadd.f32 %v826, %v938
      %v1036 = vadd.f32 %v827, %v940
      %v1037 = vadd.f32 %v828, %v942
      %v1038 = vadd.f32 %v829, %v941
      %v1039 = vadd.f32 %v830, %v943
      %v1040 = vadd.f32 %v831, %v945
      %v1041 = vadd.f32 %v832, %v944
      %v1042 = vadd.f32 %v833, %v946
      %v1043 = vadd.f32 %v834, %v948
      %v1044 = vadd.f32 %v835, %v947
      %v1045 = vadd.f32 %v836, %v949
      %v1046 = vadd.f32 %v837, %v951
      %v1047 = vadd.f32 %v838, %v950
      %v1048 = vadd.f32 %v839, %v952
      %v1049 = vadd.f32 %v840, %v954
      %v1050 = vadd.f32 %v841, %v953
      %v1051 = vadd.f32 %v842, %v955
      %v1052 = vadd.f32 %v843, %v957
      %v1053 = vadd.f32 %v844, %v956
      %v1054 = vadd.f32 %v845, %v958
      %v1055 = vadd.f32 %v846, %v960
      %v1056 = vadd.f32 %v847, %v959
      %v1057 = vadd.f32 %v848, %v961
      %v1058 = vadd.f32 %v849, %v963
      %v1059 = vadd.f32 %v850, %v962
      %v1060 = vadd.f32 %v851, %v964
      %v1061 = vadd.f32 %v852, %v966
      %v1062 = vadd.f32 %v853, %v965
      %v1063 = vadd.f32 %v854, %v967
      %v1064 = vadd.f32 %v855, %v969
      %v1065 = vadd.f32 %v856, %v968
      %v1066 = vadd.f32 %v857, %v970
      %v1067 = vadd.f32 %v858, %v972
      %v1068 = vadd.f32 %v859, %v971
      %v1069 = vperm.slane %v225, 4
      %v1070 = vmul.f32 %v174, %v1069
      %v1071 = vmul.f32 %v175, %v1069
      %v1072 = vmul.f32 %v176, %v1069
      %v1073 = vmul.f32 %v177, %v1069
      %v1074 = vmul.f32 %v178, %v1069
      %v1075 = vmul.f32 %v179, %v1069
      %v1076 = vmul.f32 %v180, %v1069
      %v1077 = vmul.f32 %v181, %v1069
      %v1078 = vmul.f32 %v182, %v1069
      %v1079 = vmul.f32 %v183, %v1069
      %v1080 = vmul.f32 %v184, %v1069
      %v1081 = vmul.f32 %v185, %v1069
      %v1082 = vmul.f32 %v186, %v1069
      %v1083 = vmul.f32 %v187, %v1069
      %v1084 = vmul.f32 %v188, %v1069
      %v1085 = vmul.f32 %v189, %v1069
      %v1086 = vmul.f32 %v190, %v1069
      %v1087 = vmul.f32 %v191, %v1069
      %v1088 = vmul.f32 %v192, %v1069
      %v1089 = vmul.f32 %v193, %v1069
      %v1090 = vmul.f32 %v194, %v1069
      %v1091 = vmul.f32 %v195, %v1069
      %v1092 = vmul.f32 %v196, %v1069
      %v1093 = vmul.f32 %v197, %v1069
      %v1094 = vmul.f32 %v198, %v1069
      %v1095 = vmul.f32 %v199, %v1069
      %v1096 = vmul.f32 %v200, %v1069
      %v1097 = vmul.f32 %v201, %v1069
      %v1098 = vmul.f32 %v202, %v1069
      %v1099 = vmul.f32 %v203, %v1069
      %v1100 = vmul.f32 %v204, %v1069
      %v1101 = vmul.f32 %v205, %v1069
      %v1102 = vmul.f32 %v206, %v1069
      %v1103 = vmul.f32 %v207, %v1069
      %v1104 = vmul.f32 %v208, %v1069
      %v1105 = vmul.f32 %v209, %v1069
      %v1106 = vmul.f32 %v210, %v1069
      %v1107 = vmul.f32 %v211, %v1069
      %v1108 = vmul.f32 %v212, %v1069
      %v1109 = vmul.f32 %v213, %v1069
      %v1110 = vmul.f32 %v214, %v1069
      %v1111 = vmul.f32 %v215, %v1069
      %v1112 = vmul.f32 %v216, %v1069
      %v1113 = vmul.f32 %v217, %v1069
      %v1114 = vmul.f32 %v218, %v1069
      %v1115 = vmul.f32 %v219, %v1069
      %v1116 = vmul.f32 %v220, %v1069
      %v1117 = vmul.f32 %v221, %v1069
      %v1118 = vadd.f32 %v1021, %v1070
      %v1119 = vadd.f32 %v1022, %v1071
      %v1120 = vadd.f32 %v1023, %v1072
      %v1121 = vadd.f32 %v1024, %v1073
      %v1122 = vadd.f32 %v1025, %v1074
      %v1123 = vadd.f32 %v1026, %v1075
      %v1124 = vadd.f32 %v1027, %v1076
      %v1125 = vadd.f32 %v1028, %v1077
      %v1126 = vadd.f32 %v1029, %v1078
      %v1127 = vadd.f32 %v1030, %v1079
      %v1128 = vadd.f32 %v1031, %v1080
      %v1129 = vadd.f32 %v1032, %v1081
      %v1130 = vadd.f32 %v1033, %v1082
      %v1131 = vadd.f32 %v1034, %v1083
      %v1132 = vadd.f32 %v1035, %v1084
      %v1133 = vadd.f32 %v1036, %v1085
      %v1134 = vadd.f32 %v1037, %v1086
      %v1135 = vadd.f32 %v1038, %v1087
      %v1136 = vadd.f32 %v1039, %v1088
      %v1137 = vadd.f32 %v1040, %v1089
      %v1138 = vadd.f32 %v1041, %v1090
      %v1139 = vadd.f32 %v1042, %v1091
      %v1140 = vadd.f32 %v1043, %v1092
      %v1141 = vadd.f32 %v1044, %v1093
      %v1142 = vadd.f32 %v1045, %v1094
      %v1143 = vadd.f32 %v1046, %v1095
      %v1144 = vadd.f32 %v1047, %v1096
      %v1145 = vadd.f32 %v1048, %v1097
      %v1146 = vadd.f32 %v1049, %v1098
      %v1147 = vadd.f32 %v1050, %v1099
      %v1148 = vadd.f32 %v1051, %v1100
      %v1149 = vadd.f32 %v1052, %v1101
      %v1150 = vadd.f32 %v1053, %v1102
      %v1151 = vadd.f32 %v1054, %v1103
      %v1152 = vadd.f32 %v1055, %v1104
      %v1153 = vadd.f32 %v1056, %v1105
      %v1154 = vadd.f32 %v1057, %v1106
      %v1155 = vadd.f32 %v1058, %v1107
      %v1156 = vadd.f32 %v1059, %v1108
      %v1157 = vadd.f32 %v1060, %v1109
      %v1158 = vadd.f32 %v1061, %v1110
      %v1159 = vadd.f32 %v1062, %v1111
      %v1160 = vadd.f32 %v1063, %v1112
      %v1161 = vadd.f32 %v1064, %v1113
      %v1162 = vadd.f32 %v1065, %v1114
      %v1163 = vadd.f32 %v1066, %v1115
      %v1164 = vadd.f32 %v1067, %v1116
      %v1165 = vadd.f32 %v1068, %v1117
      %v1166 = vperm.slane %v225, 5
      %v1167 = vmul.f32 %v174, %v1166
      %v1168 = vmul.f32 %v175, %v1166
      %v1169 = vmul.f32 %v176, %v1166
      %v1170 = vmul.f32 %v177, %v1166
      %v1171 = vmul.f32 %v178, %v1166
      %v1172 = vmul.f32 %v179, %v1166
      %v1173 = vmul.f32 %v180, %v1166
      %v1174 = vmul.f32 %v181, %v1166
      %v1175 = vmul.f32 %v182, %v1166
      %v1176 = vmul.f32 %v183, %v1166
      %v1177 = vmul.f32 %v184, %v1166
      %v1178 = vmul.f32 %v185, %v1166
      %v1179 = vmul.f32 %v186, %v1166
      %v1180 = vmul.f32 %v187, %v1166
      %v1181 = vmul.f32 %v188, %v1166
      %v1182 = vmul.f32 %v189, %v1166
      %v1183 = vmul.f32 %v190, %v1166
      %v1184 = vmul.f32 %v191, %v1166
      %v1185 = vmul.f32 %v192, %v1166
      %v1186 = vmul.f32 %v193, %v1166
      %v1187 = vmul.f32 %v194, %v1166
      %v1188 = vmul.f32 %v195, %v1166
      %v1189 = vmul.f32 %v196, %v1166
      %v1190 = vmul.f32 %v197, %v1166
      %v1191 = vmul.f32 %v198, %v1166
      %v1192 = vmul.f32 %v199, %v1166
      %v1193 = vmul.f32 %v200, %v1166
      %v1194 = vmul.f32 %v201, %v1166
      %v1195 = vmul.f32 %v202, %v1166
      %v1196 = vmul.f32 %v203, %v1166
      %v1197 = vmul.f32 %v204, %v1166
      %v1198 = vmul.f32 %v205, %v1166
      %v1199 = vmul.f32 %v206, %v1166
      %v1200 = vmul.f32 %v207, %v1166
      %v1201 = vmul.f32 %v208, %v1166
      %v1202 = vmul.f32 %v209, %v1166
      %v1203 = vmul.f32 %v210, %v1166
      %v1204 = vmul.f32 %v211, %v1166
      %v1205 = vmul.f32 %v212, %v1166
      %v1206 = vmul.f32 %v213, %v1166
      %v1207 = vmul.f32 %v214, %v1166
      %v1208 = vmul.f32 %v215, %v1166
      %v1209 = vmul.f32 %v216, %v1166
      %v1210 = vmul.f32 %v217, %v1166
      %v1211 = vmul.f32 %v218, %v1166
      %v1212 = vmul.f32 %v219, %v1166
      %v1213 = vmul.f32 %v220, %v1166
      %v1214 = vmul.f32 %v221, %v1166
      %v1263 = vrot.slane %v1167, 1
      %v1264 = vrot.slane %v1168, 1
      %v1265 = vsel %vm683, %v1263, %v1264
      %v1266 = vrot.slane %v1169, 1
      %v1267 = vsel %vm683, %v1264, %v1266
      %v1268 = vrot.slane %v1170, 1
      %v1269 = vrot.slane %v1171, 1
      %v1270 = vsel %vm683, %v1268, %v1269
      %v1271 = vrot.slane %v1172, 1
      %v1272 = vsel %vm683, %v1269, %v1271
      %v1273 = vrot.slane %v1173, 1
      %v1274 = vrot.slane %v1174, 1
      %v1275 = vsel %vm683, %v1273, %v1274
      %v1276 = vrot.slane %v1175, 1
      %v1277 = vsel %vm683, %v1274, %v1276
      %v1278 = vrot.slane %v1176, 1
      %v1279 = vrot.slane %v1177, 1
      %v1280 = vsel %vm683, %v1278, %v1279
      %v1281 = vrot.slane %v1178, 1
      %v1282 = vsel %vm683, %v1279, %v1281
      %v1283 = vrot.slane %v1179, 1
      %v1284 = vrot.slane %v1180, 1
      %v1285 = vsel %vm683, %v1283, %v1284
      %v1286 = vrot.slane %v1181, 1
      %v1287 = vsel %vm683, %v1284, %v1286
      %v1288 = vrot.slane %v1182, 1
      %v1289 = vrot.slane %v1183, 1
      %v1290 = vsel %vm683, %v1288, %v1289
      %v1291 = vrot.slane %v1184, 1
      %v1292 = vsel %vm683, %v1289, %v1291
      %v1293 = vrot.slane %v1185, 1
      %v1294 = vrot.slane %v1186, 1
      %v1295 = vsel %vm683, %v1293, %v1294
      %v1296 = vrot.slane %v1187, 1
      %v1297 = vsel %vm683, %v1294, %v1296
      %v1298 = vrot.slane %v1188, 1
      %v1299 = vrot.slane %v1189, 1
      %v1300 = vsel %vm683, %v1298, %v1299
      %v1301 = vrot.slane %v1190, 1
      %v1302 = vsel %vm683, %v1299, %v1301
      %v1303 = vrot.slane %v1191, 1
      %v1304 = vrot.slane %v1192, 1
      %v1305 = vsel %vm683, %v1303, %v1304
      %v1306 = vrot.slane %v1193, 1
      %v1307 = vsel %vm683, %v1304, %v1306
      %v1308 = vrot.slane %v1194, 1
      %v1309 = vrot.slane %v1195, 1
      %v1310 = vsel %vm683, %v1308, %v1309
      %v1311 = vrot.slane %v1196, 1
      %v1312 = vsel %vm683, %v1309, %v1311
      %v1313 = vrot.slane %v1197, 1
      %v1314 = vrot.slane %v1198, 1
      %v1315 = vsel %vm683, %v1313, %v1314
      %v1316 = vrot.slane %v1199, 1
      %v1317 = vsel %vm683, %v1314, %v1316
      %v1318 = vrot.slane %v1200, 1
      %v1319 = vrot.slane %v1201, 1
      %v1320 = vsel %vm683, %v1318, %v1319
      %v1321 = vrot.slane %v1202, 1
      %v1322 = vsel %vm683, %v1319, %v1321
      %v1323 = vrot.slane %v1203, 1
      %v1324 = vrot.slane %v1204, 1
      %v1325 = vsel %vm683, %v1323, %v1324
      %v1326 = vrot.slane %v1205, 1
      %v1327 = vsel %vm683, %v1324, %v1326
      %v1328 = vrot.slane %v1206, 1
      %v1329 = vrot.slane %v1207, 1
      %v1330 = vsel %vm683, %v1328, %v1329
      %v1331 = vrot.slane %v1208, 1
      %v1332 = vsel %vm683, %v1329, %v1331
      %v1333 = vrot.slane %v1209, 1
      %v1334 = vrot.slane %v1210, 1
      %v1335 = vsel %vm683, %v1333, %v1334
      %v1336 = vrot.slane %v1211, 1
      %v1337 = vsel %vm683, %v1334, %v1336
      %v1338 = vrot.slane %v1212, 1
      %v1339 = vrot.slane %v1213, 1
      %v1340 = vsel %vm683, %v1338, %v1339
      %v1341 = vrot.slane %v1214, 1
      %v1342 = vsel %vm683, %v1339, %v1341
      %v1391 = vadd.f32 %v1118, %v1265
      %v1392 = vadd.f32 %v1119, %v1267
      %v1393 = vadd.f32 %v1120, %v1266
      %v1394 = vadd.f32 %v1121, %v1270
      %v1395 = vadd.f32 %v1122, %v1272
      %v1396 = vadd.f32 %v1123, %v1271
      %v1397 = vadd.f32 %v1124, %v1275
      %v1398 = vadd.f32 %v1125, %v1277
      %v1399 = vadd.f32 %v1126, %v1276
      %v1400 = vadd.f32 %v1127, %v1280
      %v1401 = vadd.f32 %v1128, %v1282
      %v1402 = vadd.f32 %v1129, %v1281
      %v1403 = vadd.f32 %v1130, %v1285
      %v1404 = vadd.f32 %v1131, %v1287
      %v1405 = vadd.f32 %v1132, %v1286
      %v1406 = vadd.f32 %v1133, %v1290
      %v1407 = vadd.f32 %v1134, %v1292
      %v1408 = vadd.f32 %v1135, %v1291
      %v1409 = vadd.f32 %v1136, %v1295
      %v1410 = vadd.f32 %v1137, %v1297
      %v1411 = vadd.f32 %v1138, %v1296
      %v1412 = vadd.f32 %v1139, %v1300
      %v1413 = vadd.f32 %v1140, %v1302
      %v1414 = vadd.f32 %v1141, %v1301
      %v1415 = vadd.f32 %v1142, %v1305
      %v1416 = vadd.f32 %v1143, %v1307
      %v1417 = vadd.f32 %v1144, %v1306
      %v1418 = vadd.f32 %v1145, %v1310
      %v1419 = vadd.f32 %v1146, %v1312
      %v1420 = vadd.f32 %v1147, %v1311
      %v1421 = vadd.f32 %v1148, %v1315
      %v1422 = vadd.f32 %v1149, %v1317
      %v1423 = vadd.f32 %v1150, %v1316
      %v1424 = vadd.f32 %v1151, %v1320
      %v1425 = vadd.f32 %v1152, %v1322
      %v1426 = vadd.f32 %v1153, %v1321
      %v1427 = vadd.f32 %v1154, %v1325
      %v1428 = vadd.f32 %v1155, %v1327
      %v1429 = vadd.f32 %v1156, %v1326
      %v1430 = vadd.f32 %v1157, %v1330
      %v1431 = vadd.f32 %v1158, %v1332
      %v1432 = vadd.f32 %v1159, %v1331
      %v1433 = vadd.f32 %v1160, %v1335
      %v1434 = vadd.f32 %v1161, %v1337
      %v1435 = vadd.f32 %v1162, %v1336
      %v1436 = vadd.f32 %v1163, %v1340
      %v1437 = vadd.f32 %v1164, %v1342
      %v1438 = vadd.f32 %v1165, %v1341
      %v1439 = vperm.slane %v225, 6
      %v1440 = vmul.f32 %v177, %v1439
      %v1441 = vmul.f32 %v178, %v1439
      %v1442 = vmul.f32 %v180, %v1439
      %v1443 = vmul.f32 %v181, %v1439
      %v1444 = vmul.f32 %v183, %v1439
      %v1445 = vmul.f32 %v184, %v1439
      %v1446 = vmul.f32 %v186, %v1439
      %v1447 = vmul.f32 %v187, %v1439
      %v1448 = vmul.f32 %v189, %v1439
      %v1449 = vmul.f32 %v190, %v1439
      %v1450 = vmul.f32 %v192, %v1439
      %v1451 = vmul.f32 %v193, %v1439
      %v1452 = vmul.f32 %v195, %v1439
      %v1453 = vmul.f32 %v196, %v1439
      %v1454 = vmul.f32 %v198, %v1439
      %v1455 = vmul.f32 %v199, %v1439
      %v1456 = vmul.f32 %v201, %v1439
      %v1457 = vmul.f32 %v202, %v1439
      %v1458 = vmul.f32 %v204, %v1439
      %v1459 = vmul.f32 %v205, %v1439
      %v1460 = vmul.f32 %v207, %v1439
      %v1461 = vmul.f32 %v208, %v1439
      %v1462 = vmul.f32 %v210, %v1439
      %v1463 = vmul.f32 %v211, %v1439
      %v1464 = vmul.f32 %v213, %v1439
      %v1465 = vmul.f32 %v214, %v1439
      %v1466 = vmul.f32 %v216, %v1439
      %v1467 = vmul.f32 %v217, %v1439
      %v1468 = vmul.f32 %v219, %v1439
      %v1469 = vmul.f32 %v220, %v1439
      %v1470 = vmul.f32 %v222, %v1439
      %v1471 = vmul.f32 %v223, %v1439
      %v1504 = vrot.slane %v1440, 7
      %v1505 = vrot.slane %v1441, 7
      %v1506 = vsel %vm344, %v1504, %v1505
      %v1507 = vrot.slane %v1442, 7
      %v1508 = vrot.slane %v1443, 7
      %v1509 = vsel %vm344, %v1507, %v1508
      %v1510 = vrot.slane %v1444, 7
      %v1511 = vrot.slane %v1445, 7
      %v1512 = vsel %vm344, %v1510, %v1511
      %v1513 = vrot.slane %v1446, 7
      %v1514 = vrot.slane %v1447, 7
      %v1515 = vsel %vm344, %v1513, %v1514
      %v1516 = vrot.slane %v1448, 7
      %v1517 = vrot.slane %v1449, 7
      %v1518 = vsel %vm344, %v1516, %v1517
      %v1519 = vrot.slane %v1450, 7
      %v1520 = vrot.slane %v1451, 7
      %v1521 = vsel %vm344, %v1519, %v1520
      %v1522 = vrot.slane %v1452, 7
      %v1523 = vrot.slane %v1453, 7
      %v1524 = vsel %vm344, %v1522, %v1523
      %v1525 = vrot.slane %v1454, 7
      %v1526 = vrot.slane %v1455, 7
      %v1527 = vsel %vm344, %v1525, %v1526
      %v1528 = vrot.slane %v1456, 7
      %v1529 = vrot.slane %v1457, 7
      %v1530 = vsel %vm344, %v1528, %v1529
      %v1531 = vrot.slane %v1458, 7
      %v1532 = vrot.slane %v1459, 7
      %v1533 = vsel %vm344, %v1531, %v1532
      %v1534 = vrot.slane %v1460, 7
      %v1535 = vrot.slane %v1461, 7
      %v1536 = vsel %vm344, %v1534, %v1535
      %v1537 = vrot.slane %v1462, 7
      %v1538 = vrot.slane %v1463, 7
      %v1539 = vsel %vm344, %v1537, %v1538
      %v1540 = vrot.slane %v1464, 7
      %v1541 = vrot.slane %v1465, 7
      %v1542 = vsel %vm344, %v1540, %v1541
      %v1543 = vrot.slane %v1466, 7
      %v1544 = vrot.slane %v1467, 7
      %v1545 = vsel %vm344, %v1543, %v1544
      %v1546 = vrot.slane %v1468, 7
      %v1547 = vrot.slane %v1469, 7
      %v1548 = vsel %vm344, %v1546, %v1547
      %v1549 = vrot.slane %v1470, 7
      %v1550 = vrot.slane %v1471, 7
      %v1551 = vsel %vm344, %v1549, %v1550
      %v1600 = vadd.f32 %v1391, %v1504
      %v1601 = vadd.f32 %v1392, %v1506
      %v1602 = vadd.f32 %v1393, %v1505
      %v1603 = vadd.f32 %v1394, %v1507
      %v1604 = vadd.f32 %v1395, %v1509
      %v1605 = vadd.f32 %v1396, %v1508
      %v1606 = vadd.f32 %v1397, %v1510
      %v1607 = vadd.f32 %v1398, %v1512
      %v1608 = vadd.f32 %v1399, %v1511
      %v1609 = vadd.f32 %v1400, %v1513
      %v1610 = vadd.f32 %v1401, %v1515
      %v1611 = vadd.f32 %v1402, %v1514
      %v1612 = vadd.f32 %v1403, %v1516
      %v1613 = vadd.f32 %v1404, %v1518
      %v1614 = vadd.f32 %v1405, %v1517
      %v1615 = vadd.f32 %v1406, %v1519
      %v1616 = vadd.f32 %v1407, %v1521
      %v1617 = vadd.f32 %v1408, %v1520
      %v1618 = vadd.f32 %v1409, %v1522
      %v1619 = vadd.f32 %v1410, %v1524
      %v1620 = vadd.f32 %v1411, %v1523
      %v1621 = vadd.f32 %v1412, %v1525
      %v1622 = vadd.f32 %v1413, %v1527
      %v1623 = vadd.f32 %v1414, %v1526
      %v1624 = vadd.f32 %v1415, %v1528
      %v1625 = vadd.f32 %v1416, %v1530
      %v1626 = vadd.f32 %v1417, %v1529
      %v1627 = vadd.f32 %v1418, %v1531
      %v1628 = vadd.f32 %v1419, %v1533
      %v1629 = vadd.f32 %v1420, %v1532
      %v1630 = vadd.f32 %v1421, %v1534
      %v1631 = vadd.f32 %v1422, %v1536
      %v1632 = vadd.f32 %v1423, %v1535
      %v1633 = vadd.f32 %v1424, %v1537
      %v1634 = vadd.f32 %v1425, %v1539
      %v1635 = vadd.f32 %v1426, %v1538
      %v1636 = vadd.f32 %v1427, %v1540
      %v1637 = vadd.f32 %v1428, %v1542
      %v1638 = vadd.f32 %v1429, %v1541
      %v1639 = vadd.f32 %v1430, %v1543
      %v1640 = vadd.f32 %v1431, %v1545
      %v1641 = vadd.f32 %v1432, %v1544
      %v1642 = vadd.f32 %v1433, %v1546
      %v1643 = vadd.f32 %v1434, %v1548
      %v1644 = vadd.f32 %v1435, %v1547
      %v1645 = vadd.f32 %v1436, %v1549
      %v1646 = vadd.f32 %v1437, %v1551
      %v1647 = vadd.f32 %v1438, %v1550
      %v1648 = vperm.slane %v225, 7
      %v1649 = vmul.f32 %v177, %v1648
      %v1650 = vmul.f32 %v178, %v1648
      %v1651 = vmul.f32 %v179, %v1648
      %v1652 = vmul.f32 %v180, %v1648
      %v1653 = vmul.f32 %v181, %v1648
      %v1654 = vmul.f32 %v182, %v1648
      %v1655 = vmul.f32 %v183, %v1648
      %v1656 = vmul.f32 %v184, %v1648
      %v1657 = vmul.f32 %v185, %v1648
      %v1658 = vmul.f32 %v186, %v1648
      %v1659 = vmul.f32 %v187, %v1648
      %v1660 = vmul.f32 %v188, %v1648
      %v1661 = vmul.f32 %v189, %v1648
      %v1662 = vmul.f32 %v190, %v1648
      %v1663 = vmul.f32 %v191, %v1648
      %v1664 = vmul.f32 %v192, %v1648
      %v1665 = vmul.f32 %v193, %v1648
      %v1666 = vmul.f32 %v194, %v1648
      %v1667 = vmul.f32 %v195, %v1648
      %v1668 = vmul.f32 %v196, %v1648
      %v1669 = vmul.f32 %v197, %v1648
      %v1670 = vmul.f32 %v198, %v1648
      %v1671 = vmul.f32 %v199, %v1648
      %v1672 = vmul.f32 %v200, %v1648
      %v1673 = vmul.f32 %v201, %v1648
      %v1674 = vmul.f32 %v202, %v1648
      %v1675 = vmul.f32 %v203, %v1648
      %v1676 = vmul.f32 %v204, %v1648
      %v1677 = vmul.f32 %v205, %v1648
      %v1678 = vmul.f32 %v206, %v1648
      %v1679 = vmul.f32 %v207, %v1648
      %v1680 = vmul.f32 %v208, %v1648
      %v1681 = vmul.f32 %v209, %v1648
      %v1682 = vmul.f32 %v210, %v1648
      %v1683 = vmul.f32 %v211, %v1648
      %v1684 = vmul.f32 %v212, %v1648
      %v1685 = vmul.f32 %v213, %v1648
      %v1686 = vmul.f32 %v214, %v1648
      %v1687 = vmul.f32 %v215, %v1648
      %v1688 = vmul.f32 %v216, %v1648
      %v1689 = vmul.f32 %v217, %v1648
      %v1690 = vmul.f32 %v218, %v1648
      %v1691 = vmul.f32 %v219, %v1648
      %v1692 = vmul.f32 %v220, %v1648
      %v1693 = vmul.f32 %v221, %v1648
      %v1694 = vmul.f32 %v222, %v1648
      %v1695 = vmul.f32 %v223, %v1648
      %v1696 = vmul.f32 %v224, %v1648
      %v1697 = vadd.f32 %v1600, %v1649
      %v1698 = vadd.f32 %v1601, %v1650
      %v1699 = vadd.f32 %v1602, %v1651
      %v1700 = vadd.f32 %v1603, %v1652
      %v1701 = vadd.f32 %v1604, %v1653
      %v1702 = vadd.f32 %v1605, %v1654
      %v1703 = vadd.f32 %v1606, %v1655
      %v1704 = vadd.f32 %v1607, %v1656
      %v1705 = vadd.f32 %v1608, %v1657
      %v1706 = vadd.f32 %v1609, %v1658
      %v1707 = vadd.f32 %v1610, %v1659
      %v1708 = vadd.f32 %v1611, %v1660
      %v1709 = vadd.f32 %v1612, %v1661
      %v1710 = vadd.f32 %v1613, %v1662
      %v1711 = vadd.f32 %v1614, %v1663
      %v1712 = vadd.f32 %v1615, %v1664
      %v1713 = vadd.f32 %v1616, %v1665
      %v1714 = vadd.f32 %v1617, %v1666
      %v1715 = vadd.f32 %v1618, %v1667
      %v1716 = vadd.f32 %v1619, %v1668
      %v1717 = vadd.f32 %v1620, %v1669
      %v1718 = vadd.f32 %v1621, %v1670
      %v1719 = vadd.f32 %v1622, %v1671
      %v1720 = vadd.f32 %v1623, %v1672
      %v1721 = vadd.f32 %v1624, %v1673
      %v1722 = vadd.f32 %v1625, %v1674
      %v1723 = vadd.f32 %v1626, %v1675
      %v1724 = vadd.f32 %v1627, %v1676
      %v1725 = vadd.f32 %v1628, %v1677
      %v1726 = vadd.f32 %v1629, %v1678
      %v1727 = vadd.f32 %v1630, %v1679
      %v1728 = vadd.f32 %v1631, %v1680
      %v1729 = vadd.f32 %v1632, %v1681
      %v1730 = vadd.f32 %v1633, %v1682
      %v1731 = vadd.f32 %v1634, %v1683
      %v1732 = vadd.f32 %v1635, %v1684
      %v1733 = vadd.f32 %v1636, %v1685
      %v1734 = vadd.f32 %v1637, %v1686
      %v1735 = vadd.f32 %v1638, %v1687
      %v1736 = vadd.f32 %v1639, %v1688
      %v1737 = vadd.f32 %v1640, %v1689
      %v1738 = vadd.f32 %v1641, %v1690
      %v1739 = vadd.f32 %v1642, %v1691
      %v1740 = vadd.f32 %v1643, %v1692
      %v1741 = vadd.f32 %v1644, %v1693
      %v1742 = vadd.f32 %v1645, %v1694
      %v1743 = vadd.f32 %v1646, %v1695
      %v1744 = vadd.f32 %v1647, %v1696
      %v1745 = vperm.slane %v226, 0
      %v1746 = vmul.f32 %v177, %v1745
      %v1747 = vmul.f32 %v178, %v1745
      %v1748 = vmul.f32 %v179, %v1745
      %v1749 = vmul.f32 %v180, %v1745
      %v1750 = vmul.f32 %v181, %v1745
      %v1751 = vmul.f32 %v182, %v1745
      %v1752 = vmul.f32 %v183, %v1745
      %v1753 = vmul.f32 %v184, %v1745
      %v1754 = vmul.f32 %v185, %v1745
      %v1755 = vmul.f32 %v186, %v1745
      %v1756 = vmul.f32 %v187, %v1745
      %v1757 = vmul.f32 %v188, %v1745
      %v1758 = vmul.f32 %v189, %v1745
      %v1759 = vmul.f32 %v190, %v1745
      %v1760 = vmul.f32 %v191, %v1745
      %v1761 = vmul.f32 %v192, %v1745
      %v1762 = vmul.f32 %v193, %v1745
      %v1763 = vmul.f32 %v194, %v1745
      %v1764 = vmul.f32 %v195, %v1745
      %v1765 = vmul.f32 %v196, %v1745
      %v1766 = vmul.f32 %v197, %v1745
      %v1767 = vmul.f32 %v198, %v1745
      %v1768 = vmul.f32 %v199, %v1745
      %v1769 = vmul.f32 %v200, %v1745
      %v1770 = vmul.f32 %v201, %v1745
      %v1771 = vmul.f32 %v202, %v1745
      %v1772 = vmul.f32 %v203, %v1745
      %v1773 = vmul.f32 %v204, %v1745
      %v1774 = vmul.f32 %v205, %v1745
      %v1775 = vmul.f32 %v206, %v1745
      %v1776 = vmul.f32 %v207, %v1745
      %v1777 = vmul.f32 %v208, %v1745
      %v1778 = vmul.f32 %v209, %v1745
      %v1779 = vmul.f32 %v210, %v1745
      %v1780 = vmul.f32 %v211, %v1745
      %v1781 = vmul.f32 %v212, %v1745
      %v1782 = vmul.f32 %v213, %v1745
      %v1783 = vmul.f32 %v214, %v1745
      %v1784 = vmul.f32 %v215, %v1745
      %v1785 = vmul.f32 %v216, %v1745
      %v1786 = vmul.f32 %v217, %v1745
      %v1787 = vmul.f32 %v218, %v1745
      %v1788 = vmul.f32 %v219, %v1745
      %v1789 = vmul.f32 %v220, %v1745
      %v1790 = vmul.f32 %v221, %v1745
      %v1791 = vmul.f32 %v222, %v1745
      %v1792 = vmul.f32 %v223, %v1745
      %v1793 = vmul.f32 %v224, %v1745
      %v1842 = vrot.slane %v1746, 1
      %v1843 = vrot.slane %v1747, 1
      %v1844 = vsel %vm683, %v1842, %v1843
      %v1845 = vrot.slane %v1748, 1
      %v1846 = vsel %vm683, %v1843, %v1845
      %v1847 = vrot.slane %v1749, 1
      %v1848 = vrot.slane %v1750, 1
      %v1849 = vsel %vm683, %v1847, %v1848
      %v1850 = vrot.slane %v1751, 1
      %v1851 = vsel %vm683, %v1848, %v1850
      %v1852 = vrot.slane %v1752, 1
      %v1853 = vrot.slane %v1753, 1
      %v1854 = vsel %vm683, %v1852, %v1853
      %v1855 = vrot.slane %v1754, 1
      %v1856 = vsel %vm683, %v1853, %v1855
      %v1857 = vrot.slane %v1755, 1
      %v1858 = vrot.slane %v1756, 1
      %v1859 = vsel %vm683, %v1857, %v1858
      %v1860 = vrot.slane %v1757, 1
      %v1861 = vsel %vm683, %v1858, %v1860
      %v1862 = vrot.slane %v1758, 1
      %v1863 = vrot.slane %v1759, 1
      %v1864 = vsel %vm683, %v1862, %v1863
      %v1865 = vrot.slane %v1760, 1
      %v1866 = vsel %vm683, %v1863, %v1865
      %v1867 = vrot.slane %v1761, 1
      %v1868 = vrot.slane %v1762, 1
      %v1869 = vsel %vm683, %v1867, %v1868
      %v1870 = vrot.slane %v1763, 1
      %v1871 = vsel %vm683, %v1868, %v1870
      %v1872 = vrot.slane %v1764, 1
      %v1873 = vrot.slane %v1765, 1
      %v1874 = vsel %vm683, %v1872, %v1873
      %v1875 = vrot.slane %v1766, 1
      %v1876 = vsel %vm683, %v1873, %v1875
      %v1877 = vrot.slane %v1767, 1
      %v1878 = vrot.slane %v1768, 1
      %v1879 = vsel %vm683, %v1877, %v1878
      %v1880 = vrot.slane %v1769, 1
      %v1881 = vsel %vm683, %v1878, %v1880
      %v1882 = vrot.slane %v1770, 1
      %v1883 = vrot.slane %v1771, 1
      %v1884 = vsel %vm683, %v1882, %v1883
      %v1885 = vrot.slane %v1772, 1
      %v1886 = vsel %vm683, %v1883, %v1885
      %v1887 = vrot.slane %v1773, 1
      %v1888 = vrot.slane %v1774, 1
      %v1889 = vsel %vm683, %v1887, %v1888
      %v1890 = vrot.slane %v1775, 1
      %v1891 = vsel %vm683, %v1888, %v1890
      %v1892 = vrot.slane %v1776, 1
      %v1893 = vrot.slane %v1777, 1
      %v1894 = vsel %vm683, %v1892, %v1893
      %v1895 = vrot.slane %v1778, 1
      %v1896 = vsel %vm683, %v1893, %v1895
      %v1897 = vrot.slane %v1779, 1
      %v1898 = vrot.slane %v1780, 1
      %v1899 = vsel %vm683, %v1897, %v1898
      %v1900 = vrot.slane %v1781, 1
      %v1901 = vsel %vm683, %v1898, %v1900
      %v1902 = vrot.slane %v1782, 1
      %v1903 = vrot.slane %v1783, 1
      %v1904 = vsel %vm683, %v1902, %v1903
      %v1905 = vrot.slane %v1784, 1
      %v1906 = vsel %vm683, %v1903, %v1905
      %v1907 = vrot.slane %v1785, 1
      %v1908 = vrot.slane %v1786, 1
      %v1909 = vsel %vm683, %v1907, %v1908
      %v1910 = vrot.slane %v1787, 1
      %v1911 = vsel %vm683, %v1908, %v1910
      %v1912 = vrot.slane %v1788, 1
      %v1913 = vrot.slane %v1789, 1
      %v1914 = vsel %vm683, %v1912, %v1913
      %v1915 = vrot.slane %v1790, 1
      %v1916 = vsel %vm683, %v1913, %v1915
      %v1917 = vrot.slane %v1791, 1
      %v1918 = vrot.slane %v1792, 1
      %v1919 = vsel %vm683, %v1917, %v1918
      %v1920 = vrot.slane %v1793, 1
      %v1921 = vsel %vm683, %v1918, %v1920
      %v1970 = vadd.f32 %v1697, %v1844
      %v1971 = vadd.f32 %v1698, %v1846
      %v1972 = vadd.f32 %v1699, %v1845
      %v1973 = vadd.f32 %v1700, %v1849
      %v1974 = vadd.f32 %v1701, %v1851
      %v1975 = vadd.f32 %v1702, %v1850
      %v1976 = vadd.f32 %v1703, %v1854
      %v1977 = vadd.f32 %v1704, %v1856
      %v1978 = vadd.f32 %v1705, %v1855
      %v1979 = vadd.f32 %v1706, %v1859
      %v1980 = vadd.f32 %v1707, %v1861
      %v1981 = vadd.f32 %v1708, %v1860
      %v1982 = vadd.f32 %v1709, %v1864
      %v1983 = vadd.f32 %v1710, %v1866
      %v1984 = vadd.f32 %v1711, %v1865
      %v1985 = vadd.f32 %v1712, %v1869
      %v1986 = vadd.f32 %v1713, %v1871
      %v1987 = vadd.f32 %v1714, %v1870
      %v1988 = vadd.f32 %v1715, %v1874
      %v1989 = vadd.f32 %v1716, %v1876
      %v1990 = vadd.f32 %v1717, %v1875
      %v1991 = vadd.f32 %v1718, %v1879
      %v1992 = vadd.f32 %v1719, %v1881
      %v1993 = vadd.f32 %v1720, %v1880
      %v1994 = vadd.f32 %v1721, %v1884
      %v1995 = vadd.f32 %v1722, %v1886
      %v1996 = vadd.f32 %v1723, %v1885
      %v1997 = vadd.f32 %v1724, %v1889
      %v1998 = vadd.f32 %v1725, %v1891
      %v1999 = vadd.f32 %v1726, %v1890
      %v2000 = vadd.f32 %v1727, %v1894
      %v2001 = vadd.f32 %v1728, %v1896
      %v2002 = vadd.f32 %v1729, %v1895
      %v2003 = vadd.f32 %v1730, %v1899
      %v2004 = vadd.f32 %v1731, %v1901
      %v2005 = vadd.f32 %v1732, %v1900
      %v2006 = vadd.f32 %v1733, %v1904
      %v2007 = vadd.f32 %v1734, %v1906
      %v2008 = vadd.f32 %v1735, %v1905
      %v2009 = vadd.f32 %v1736, %v1909
      %v2010 = vadd.f32 %v1737, %v1911
      %v2011 = vadd.f32 %v1738, %v1910
      %v2012 = vadd.f32 %v1739, %v1914
      %v2013 = vadd.f32 %v1740, %v1916
      %v2014 = vadd.f32 %v1741, %v1915
      %v2015 = vadd.f32 %v1742, %v1919
      %v2016 = vadd.f32 %v1743, %v1921
      %v2017 = vadd.f32 %v1744, %v1920
      %2018 = vst [vmem:[%s170 - $0x1] sm:$0xfe] %v1970
      %2019 = vst [vmem:[%s170 + $0x7] sm:$0xff] %v1971
      %2020 = vst [vmem:[%s170 + $0xf] sm:$0x1] %v1972
      %2021 = vst [vmem:[%s170 + $0xf] sm:$0xfe] %v1973
      %2022 = vst [vmem:[%s170 + $0x17] sm:$0xff] %v1974
      %2023 = vst [vmem:[%s170 + $0x1f] sm:$0x1] %v1975
      %2024 = vst [vmem:[%s170 + $0x1f] sm:$0xfe] %v1976
      %2025 = vst [vmem:[%s170 + $0x27] sm:$0xff] %v1977
      %2026 = vst [vmem:[%s170 + $0x2f] sm:$0x1] %v1978
      %2027 = vst [vmem:[%s170 + $0x2f] sm:$0xfe] %v1979
      %2028 = vst [vmem:[%s170 + $0x37] sm:$0xff] %v1980
      %2029 = vst [vmem:[%s170 + $0x3f] sm:$0x1] %v1981
      %2030 = vst [vmem:[%s170 + $0x3f] sm:$0xfe] %v1982
      %2031 = vst [vmem:[%s170 + $0x47] sm:$0xff] %v1983
      %2032 = vst [vmem:[%s170 + $0x4f] sm:$0x1] %v1984
      %2033 = vst [vmem:[%s170 + $0x4f] sm:$0xfe] %v1985
      %2034 = vst [vmem:[%s170 + $0x57] sm:$0xff] %v1986
      %2035 = vst [vmem:[%s170 + $0x5f] sm:$0x1] %v1987
      %2036 = vst [vmem:[%s170 + $0x5f] sm:$0xfe] %v1988
      %2037 = vst [vmem:[%s170 + $0x67] sm:$0xff] %v1989
      %2038 = vst [vmem:[%s170 + $0x6f] sm:$0x1] %v1990
      %2039 = vst [vmem:[%s170 + $0x6f] sm:$0xfe] %v1991
      %2040 = vst [vmem:[%s170 + $0x77] sm:$0xff] %v1992
      %2041 = vst [vmem:[%s170 + $0x7f] sm:$0x1] %v1993
      %2042 = vst [vmem:[%s170 + $0x7f] sm:$0xfe] %v1994
      %2043 = vst [vmem:[%s170 + $0x87] sm:$0xff] %v1995
      %2044 = vst [vmem:[%s170 + $0x8f] sm:$0x1] %v1996
      %2045 = vst [vmem:[%s170 + $0x8f] sm:$0xfe] %v1997
      %2046 = vst [vmem:[%s170 + $0x97] sm:$0xff] %v1998
      %2047 = vst [vmem:[%s170 + $0x9f] sm:$0x1] %v1999
      %2048 = vst [vmem:[%s170 + $0x9f] sm:$0xfe] %v2000
      %2049 = vst [vmem:[%s170 + $0xa7] sm:$0xff] %v2001
      %2050 = vst [vmem:[%s170 + $0xaf] sm:$0x1] %v2002
      %2051 = vst [vmem:[%s170 + $0xaf] sm:$0xfe] %v2003
      %2052 = vst [vmem:[%s170 + $0xb7] sm:$0xff] %v2004
      %2053 = vst [vmem:[%s170 + $0xbf] sm:$0x1] %v2005
      %2054 = vst [vmem:[%s170 + $0xbf] sm:$0xfe] %v2006
      %2055 = vst [vmem:[%s170 + $0xc7] sm:$0xff] %v2007
      %2056 = vst [vmem:[%s170 + $0xcf] sm:$0x1] %v2008
      %2057 = vst [vmem:[%s170 + $0xcf] sm:$0xfe] %v2009
      %2058 = vst [vmem:[%s170 + $0xd7] sm:$0xff] %v2010
      %2059 = vst [vmem:[%s170 + $0xdf] sm:$0x1] %v2011
      %2060 = vst [vmem:[%s170 + $0xdf] sm:$0xfe] %v2012
      %2061 = vst [vmem:[%s170 + $0xe7] sm:$0xff] %v2013
      %2062 = vst [vmem:[%s170 + $0xef] sm:$0x1] %v2014
      %2063 = vst [vmem:[%s170 + $0xef] sm:$0xfe] %v2015
      %2064 = vst [vmem:[%s170 + $0xf7] sm:$0xff] %v2016
      %2065 = vst [vmem:[%s170 + $0xff] sm:$0x1] %v2017
      %p2066 = scmp.lt.s32.totalorder %s14, 1
      %s2067 = scalar_select %p2066, %s14, 1
      %s2068 = smul.addr %s2067, 32
      %s2069 = smul.addr %s2068, 8
      %s2070 = scalar_lea.vmem %s3, %s2069
      // Predicated region
      $region33: #{local_perception_unit.1} parent=31 // pred_check
        %p2071 = pneg %p100
      $region34: #{local_perception_unit.1} parent=31 // pred_check_branch
        %2073 = sbr.rel (%p2071) target = $region36
      $region35: #{local_perception_unit.1} parent=31 // pred_region
        _
      $region36: #{local_perception_unit.1} parent=31 // pred_fallthru
        _
    $region32: #{local_perception_unit.1} parent=5 // pred_fallthru
      _
    %p2074 = scmp.le.s32.totalorder 2, %s9
    // Predicated region
    $region37: #{local_perception_unit.1} parent=5 // pred_check
      %p2075 = pneg %p2074
    $region38: #{local_perception_unit.1} parent=5 // pred_check_branch
      %2077 = sbr.rel (%p2075) target = $region40
    $region39: #{local_perception_unit.1} parent=5 // pred_region
      %s2078 = ssub.s32 %s9, 2
      // Predicated region
      $region41: #{local_perception_unit.1} parent=39 // pred_check
        %p2079 = pneg %p106
      $region42: #{local_perception_unit.1} parent=39 // pred_check_branch
        %2081 = sbr.rel (%p2079) target = $region44
      $region43: #{local_perception_unit.1} parent=39 // pred_region
        %p2082 = scmp.lt.s32.totalorder %s15, 1
        %s2083 = scalar_select %p2082, %s15, 1
        %s2084 = smul.addr %s2083, 32
        %s2085 = smul.addr %s2084, 8
        %s2086 = scalar_lea.vmem %s3, %s2085
      $region44: #{local_perception_unit.1} parent=39 // pred_fallthru
        _
    $region40: #{local_perception_unit.1} parent=5 // pred_fallthru
      _
  $region6: #{local_perception_unit.1} parent=0 // loop_footer
    %s13 = sadd.s32 1, %s9
  $region7: #{local_perception_unit.1} parent=0 // loop_footer_branch
    %8 = sbr.rel target = $region3
  $region8: #{local_perception_unit.1} parent=0 // loop_exit
    _

</llo_original>
